<compile_context>
chip_gen: v6e
topology: v6e:2x2x1
jax: 0.10.0
libtpu: 0.0.40
codegen_flags: <defaults>
</compile_context>

<pallas_src>
import functools

import jax
import jax.numpy as jnp
from jax import lax
from jax.experimental import pallas as pl
from jax.experimental.pallas import tpu as pltpu


def _prelu(x, a):
    # a is a (1, 1) slab that broadcasts; PReLU(x) = max(0,x) + a*min(0,x)
    return jnp.where(x > 0, x, a * x)


# ------------------------ fused embed + GAT-stack kernel ---------------------
def _gnn_kernel(heads, emb_dim, num_layer, embed_input,
                # resident (constant index_map) inputs
                x_ref, w_emb_t_ref, src_oh_ref, tgt_oh_ref, eattr_ref,
                expand_ref, headmean_ref, gnn_a_ref,
                # per-layer (stacked, index_map = l) inputs
                w_lin_t_ref, b_lin_ref, att_i_ref, att_j_ref, bias_ref,
                w_edge_t_ref, b_edge_ref, ln_g_ref, ln_b_ref, conv_a_ref,
                # output block (constant index_map) also carries h across layers
                out_ref):
    l = pl.program_id(0)
    a_gnn = gnn_a_ref[...]                                    # (1, 1)
    a_conv = conv_a_ref[...]                                  # (1, 1)

    # ---- step 0: write the input node embedding into the resident output ---
    @pl.when(l == 0)
    def _():
        if embed_input:
            out_ref[...] = _prelu(
                jnp.dot(x_ref[...], w_emb_t_ref[...],
                        preferred_element_type=jnp.float32), a_gnn)
        else:
            out_ref[...] = x_ref[...]

    h = out_ref[...]                                          # (N, D)
    src_oh = src_oh_ref[...]                                  # (E, N)  one-hot edge_index[0]
    tgt_oh = tgt_oh_ref[...]                                  # (E, N)  one-hot edge_index[1]

    # x = PReLU(weight_linear(h))                                (N, H*D)
    xw = _prelu(jnp.dot(h, w_lin_t_ref[...],
                        preferred_element_type=jnp.float32) + b_lin_ref[...],
                a_conv)
    # edge_embeddings = PReLU(edge_embedding(edge_attr))          (E, H*D)
    ee = _prelu(jnp.dot(eattr_ref[...], w_edge_t_ref[...],
                        preferred_element_type=jnp.float32) + b_edge_ref[...],
                a_conv)

    # per-edge gathers via one-hot matmuls, all heads at once (lane-dense)
    x_j = jnp.dot(src_oh, xw, preferred_element_type=jnp.float32) + ee   # (E, H*D)
    x_i = jnp.dot(tgt_oh, xw, preferred_element_type=jnp.float32)        # (E, H*D)

    # attention logits for all heads at once: (E, H)
    alpha = (jnp.dot(x_i, att_i_ref[...], preferred_element_type=jnp.float32) +
             jnp.dot(x_j, att_j_ref[...], preferred_element_type=jnp.float32))
    alpha = _prelu(alpha, a_conv)

    # segment softmax grouped by source node (edge_index[0]), as
    # torch_geometric.utils.softmax (max-shift + 1e-16 in the denominator).
    mask_add = (src_oh - 1.0) * 1e30                          # 0 member / -1e30 non-member
    seg_max_rows = []
    for hh in range(heads):                                   # cheap max-only loop
        masked = alpha[:, hh:hh + 1] * src_oh + mask_add      # (E, N) FMA
        seg_max_rows.append(jnp.max(masked, axis=0, keepdims=True))   # (1, N)
    seg_max_hn = jnp.concatenate(seg_max_rows, axis=0)        # (H, N)

    # gather the per-source max back to edges: (E,N) x (H,N)^T -> (E, H)
    max_e = lax.dot_general(src_oh, seg_max_hn,
                            (((1,), (1,)), ((), ())),
                            preferred_element_type=jnp.float32)
    ex = jnp.exp(alpha - max_e)                               # (E, H)
    # per-source sums: contract the edge axis of the one-hot directly
    seg_sum = lax.dot_general(src_oh, ex,
                              (((0,), (0,)), ((), ())),
                              preferred_element_type=jnp.float32)        # (N, H)
    denom = jnp.dot(src_oh, seg_sum,
                    preferred_element_type=jnp.float32) + 1e-16          # (E, H)
    alpha_n = ex * pl.reciprocal(denom, approx=True)          # (E, H)

    # broadcast per-head weights to full lane width and weight the messages
    alpha_full = jnp.dot(alpha_n, expand_ref[...],
                         preferred_element_type=jnp.float32)  # (E, H*D)
    weighted = x_j * alpha_full                               # (E, H*D)

    # scatter-add to target nodes at full lane width, then head-mean (+ bias)
    node_msg = lax.dot_general(tgt_oh, weighted,
                               (((0,), (0,)), ((), ())),
                               preferred_element_type=jnp.float32)       # (N, H*D)
    aggr = jnp.dot(node_msg, headmean_ref[...],
                   preferred_element_type=jnp.float32) + bias_ref[...]   # (N, D)

    # LayerNorm over the feature dim (eps = 1e-5, torch.nn.LayerNorm default)
    mu = jnp.mean(aggr, axis=-1, keepdims=True)
    var = jnp.mean((aggr - mu) ** 2, axis=-1, keepdims=True)
    hn = (aggr - mu) * lax.rsqrt(var + 1e-5)
    hn = hn * ln_g_ref[...] + ln_b_ref[...]

    # PReLU on all but the last layer.
    # TODO(synk): F.dropout with drop_ratio=0 is the identity; a nonzero
    # drop_ratio would need pltpu.prng_* inside the kernel.
    @pl.when(l != num_layer - 1)
    def _():
        out_ref[...] = _prelu(hn, a_gnn)

    @pl.when(l == num_layer - 1)
    def _():
        out_ref[...] = hn


# ------------------------------- parameters ----------------------------------
def make_params(key, num_layer, emb_dim, atom_feat_dim, bond_feat_dim, heads):
    hd = heads * emb_dim
    keys = jax.random.split(key, 1 + num_layer)
    w_emb = jax.random.normal(keys[0], (emb_dim, atom_feat_dim), jnp.float32) * 0.1

    eye_h = jnp.eye(heads, dtype=jnp.float32)
    w_lin_t, b_lin, att_i_bd, att_j_bd = [], [], [], []
    bias, w_edge_t, b_edge, ln_g, ln_b, conv_a = [], [], [], [], [], []
    for l in range(num_layer):
        ks = jax.random.split(keys[1 + l], 5)
        w_lin = jax.random.normal(ks[0], (hd, emb_dim), jnp.float32) * 0.1
        w_lin_t.append(w_lin.T)
        b_lin.append(jax.random.normal(ks[1], (1, hd), jnp.float32) * 0.05)
        att = jax.random.normal(ks[2], (heads, 2 * emb_dim), jnp.float32) * 0.1
        # block-diagonal att matrices (H*D, H): row h*D+d, col h -> att[h, d]
        att_i_bd.append((att[:, :emb_dim][:, :, None] * eye_h[:, None, :])
                        .reshape(hd, heads))
        att_j_bd.append((att[:, emb_dim:][:, :, None] * eye_h[:, None, :])
                        .reshape(hd, heads))
        bias.append(jnp.zeros((1, emb_dim), jnp.float32))       # zeros(self.bias)
        w_edge = jax.random.normal(ks[3], (hd, bond_feat_dim), jnp.float32) * 0.1
        w_edge_t.append(w_edge.T)
        b_edge.append(jax.random.normal(ks[4], (1, hd), jnp.float32) * 0.05)
        ln_g.append(jnp.ones((1, emb_dim), jnp.float32))
        ln_b.append(jnp.zeros((1, emb_dim), jnp.float32))
        conv_a.append(jnp.full((1, 1), 0.25, jnp.float32))       # PReLU default

    stack = lambda xs: jnp.stack(xs, axis=0)
    return dict(
        w_emb_t=w_emb.T,
        gnn_a=jnp.full((1, 1), 0.25, jnp.float32),               # GNN-level PReLU
        w_lin_t=stack(w_lin_t), b_lin=stack(b_lin),
        att_i_bd=stack(att_i_bd), att_j_bd=stack(att_j_bd),
        bias=stack(bias), w_edge_t=stack(w_edge_t), b_edge=stack(b_edge),
        ln_g=stack(ln_g), ln_b=stack(ln_b), conv_a=stack(conv_a))


# ------------------------------- GNN forward ---------------------------------
def gnn_forward(x, edge_index, edge_attr, params, *, num_layer, emb_dim, heads,
                bond_feat_dim, embed_input=True):
    n = x.shape[0]
    hd = heads * emb_dim

    # add_self_loops: append (i, i) edges after the existing ones (zero attr)
    loops = jnp.arange(n, dtype=edge_index.dtype)
    ei = jnp.concatenate([edge_index, jnp.stack([loops, loops], axis=0)], axis=1)
    ea = jnp.concatenate([edge_attr.astype(jnp.float32),
                          jnp.zeros((n, bond_feat_dim), jnp.float32)], axis=0)
    e = ei.shape[1]

    # TODO(synk): beyond toy graph sizes, replace the dense (E, N) one-hots with
    # scalar-prefetched edge_index gathers (PrefetchScalarGridSpec + pl.ds) and
    # tile nodes/edges on a "parallel" grid axis (v7x second TensorCore); also
    # batch many small graphs per call instead of one call per graph.
    src_oh = jax.nn.one_hot(ei[0], n, dtype=jnp.float32)        # (E, N)
    tgt_oh = jax.nn.one_hot(ei[1], n, dtype=jnp.float32)        # (E, N)

    # constant helper matrices (exact 0/1 and 1/heads entries)
    expand_mat = jnp.repeat(jnp.eye(heads, dtype=jnp.float32), emb_dim, axis=1)      # (H, H*D)
    headmean_mat = jnp.tile(jnp.eye(emb_dim, dtype=jnp.float32), (heads, 1)) / heads  # (H*D, D)

    x_in = x.astype(jnp.float32)

    full2 = lambda shape: pl.BlockSpec(shape, lambda l: (0, 0))
    per_layer = lambda shape: pl.BlockSpec((None,) + shape, lambda l: (l, 0, 0))

    kern = functools.partial(_gnn_kernel, heads, emb_dim, num_layer, embed_input)
    out = pl.pallas_call(
        kern,
        out_shape=jax.ShapeDtypeStruct((n, emb_dim), jnp.float32),
        grid=(num_layer,),
        in_specs=[
            full2(x_in.shape),                      # x
            full2(params["w_emb_t"].shape),         # x_embedding weight^T
            full2((e, n)),                          # src one-hot
            full2((e, n)),                          # tgt one-hot
            full2((e, bond_feat_dim)),              # edge_attr (with self loops)
            full2((heads, hd)),                     # head -> lane expand matrix
            full2((hd, emb_dim)),                   # head-mean matrix
            full2((1, 1)),                          # GNN PReLU a
            per_layer((emb_dim, hd)),               # weight_linear^T
            per_layer((1, hd)),                     # weight_linear bias
            per_layer((hd, heads)),                 # att (x_i half, block-diag)
            per_layer((hd, heads)),                 # att (x_j half, block-diag)
            per_layer((1, emb_dim)),                # GATConv bias
            per_layer((bond_feat_dim, hd)),         # edge_embedding^T
            per_layer((1, hd)),                     # edge_embedding bias
            per_layer((1, emb_dim)),                # LayerNorm gamma
            per_layer((1, emb_dim)),                # LayerNorm beta
            per_layer((1, 1)),                      # GATConv PReLU a
        ],
        out_specs=pl.BlockSpec((n, emb_dim), lambda l: (0, 0)),
        compiler_params=pltpu.CompilerParams(
            dimension_semantics=("arbitrary",)),
    )(x_in, params["w_emb_t"], src_oh, tgt_oh, ea, expand_mat, headmean_mat,
      params["gnn_a"], params["w_lin_t"], params["b_lin"],
      params["att_i_bd"], params["att_j_bd"], params["bias"],
      params["w_edge_t"], params["b_edge"], params["ln_g"], params["ln_b"],
      params["conv_a"])
    return out                                               # JK == 'last'


# ----------------------------------- main ------------------------------------
if __name__ == "__main__":
    num_layer = 2
    emb_dim = 32
    atom_feat_dim = 24
    bond_feat_dim = 8
    heads = 4
    N, E = 16, 24

    key = jax.random.PRNGKey(0)
    kx, ks, kd, ke, kp = jax.random.split(key, 5)
    x = jax.random.normal(kx, (N, atom_feat_dim), jnp.float32)
    src = jax.random.randint(ks, (E,), 0, N, dtype=jnp.int32)
    dst = jax.random.randint(kd, (E,), 0, N, dtype=jnp.int32)
    edge_index = jnp.stack([src, dst], axis=0)                 # (2, E)
    edge_attr = jax.random.normal(ke, (E, bond_feat_dim), jnp.float32)

    params = make_params(kp, num_layer, emb_dim, atom_feat_dim, bond_feat_dim, heads)

    out = gnn_forward(x, edge_index, edge_attr, params,
                      num_layer=num_layer, emb_dim=emb_dim, heads=heads,
                      bond_feat_dim=bond_feat_dim)
    jax.block_until_ready(out)
    assert out.shape == (N, emb_dim)
    assert bool(jnp.all(jnp.isfinite(out)))
    print("KERNEL_OK")
</pallas_src>

<mosaic_0001>
module attributes {stable_mosaic.version = 11 : i64} {
  func.func @_gnn_kernel(%arg0: i32, %arg1: memref<16x24xf32, #tpu.memory_space<vmem>>, %arg2: memref<24x32xf32, #tpu.memory_space<vmem>>, %arg3: memref<40x16xf32, #tpu.memory_space<vmem>>, %arg4: memref<40x16xf32, #tpu.memory_space<vmem>>, %arg5: memref<40x8xf32, #tpu.memory_space<vmem>>, %arg6: memref<4x128xf32, #tpu.memory_space<vmem>>, %arg7: memref<128x32xf32, #tpu.memory_space<vmem>>, %arg8: memref<1x1xf32, #tpu.memory_space<vmem>>, %arg9: memref<1x32x128xf32, #tpu.memory_space<vmem>>, %arg10: memref<1x1x128xf32, #tpu.memory_space<vmem>>, %arg11: memref<1x128x4xf32, #tpu.memory_space<vmem>>, %arg12: memref<1x128x4xf32, #tpu.memory_space<vmem>>, %arg13: memref<1x1x32xf32, #tpu.memory_space<vmem>>, %arg14: memref<1x8x128xf32, #tpu.memory_space<vmem>>, %arg15: memref<1x1x128xf32, #tpu.memory_space<vmem>>, %arg16: memref<1x1x32xf32, #tpu.memory_space<vmem>>, %arg17: memref<1x1x32xf32, #tpu.memory_space<vmem>>, %arg18: memref<1x1x1xf32, #tpu.memory_space<vmem>>, %arg19: memref<16x32xf32, #tpu.memory_space<vmem>>) attributes {dimension_semantics = [#tpu.dimension_semantics<arbitrary>], iteration_bounds = array<i64: 2>, scalar_prefetch = 0 : i64, scratch_operands = 0 : i64, tpu.core_type = #tpu.core_type<tc>, window_params = [{pipeline_mode = #tpu.pipeline_mode<synchronous>, transform_indices = @transform_0, window_bounds = array<i64: 16, 24>}, {pipeline_mode = #tpu.pipeline_mode<synchronous>, transform_indices = @transform_1, window_bounds = array<i64: 24, 32>}, {pipeline_mode = #tpu.pipeline_mode<synchronous>, transform_indices = @transform_2, window_bounds = array<i64: 40, 16>}, {pipeline_mode = #tpu.pipeline_mode<synchronous>, transform_indices = @transform_3, window_bounds = array<i64: 40, 16>}, {pipeline_mode = #tpu.pipeline_mode<synchronous>, transform_indices = @transform_4, window_bounds = array<i64: 40, 8>}, {pipeline_mode = #tpu.pipeline_mode<synchronous>, transform_indices = @transform_5, window_bounds = array<i64: 4, 128>}, {pipeline_mode = #tpu.pipeline_mode<synchronous>, transform_indices = @transform_6, window_bounds = array<i64: 128, 32>}, {pipeline_mode = #tpu.pipeline_mode<synchronous>, transform_indices = @transform_7, window_bounds = array<i64: 1, 1>}, {transform_indices = @transform_8, window_bounds = array<i64: 1, 32, 128>}, {transform_indices = @transform_9, window_bounds = array<i64: 1, 1, 128>}, {transform_indices = @transform_10, window_bounds = array<i64: 1, 128, 4>}, {transform_indices = @transform_11, window_bounds = array<i64: 1, 128, 4>}, {transform_indices = @transform_12, window_bounds = array<i64: 1, 1, 32>}, {transform_indices = @transform_13, window_bounds = array<i64: 1, 8, 128>}, {transform_indices = @transform_14, window_bounds = array<i64: 1, 1, 128>}, {transform_indices = @transform_15, window_bounds = array<i64: 1, 1, 32>}, {transform_indices = @transform_16, window_bounds = array<i64: 1, 1, 32>}, {transform_indices = @transform_17, window_bounds = array<i64: 1, 1, 1>}, {pipeline_mode = #tpu.pipeline_mode<synchronous>, transform_indices = @transform_18, window_bounds = array<i64: 16, 32>}]} {
    %c0 = arith.constant 0 : index
    %c0_0 = arith.constant 0 : index
    %0 = vector.load %arg8[%c0, %c0_0] : memref<1x1xf32, #tpu.memory_space<vmem>>, vector<1x1xf32>
    %c0_1 = arith.constant 0 : index
    %c0_2 = arith.constant 0 : index
    %c0_3 = arith.constant 0 : index
    %1 = vector.load %arg18[%c0_1, %c0_2, %c0_3] : memref<1x1x1xf32, #tpu.memory_space<vmem>>, vector<1x1x1xf32>
    %2 = vector.shape_cast %1 : vector<1x1x1xf32> to vector<1x1xf32>
    %c0_i32 = arith.constant 0 : i32
    %3 = arith.cmpi eq, %arg0, %c0_i32 : i32
    %4 = arith.extui %3 : i1 to i32
    %c0_i32_4 = arith.constant 0 : i32
    %5 = arith.cmpi ne, %4, %c0_i32_4 : i32
    scf.if %5 {
      %c0_73 = arith.constant 0 : index
      %c0_74 = arith.constant 0 : index
      %129 = vector.load %arg1[%c0_73, %c0_74] : memref<16x24xf32, #tpu.memory_space<vmem>>, vector<16x24xf32>
      %c0_75 = arith.constant 0 : index
      %c0_76 = arith.constant 0 : index
      %130 = vector.load %arg2[%c0_75, %c0_76] : memref<24x32xf32, #tpu.memory_space<vmem>>, vector<24x32xf32>
      %cst_77 = arith.constant dense<0.000000e+00> : vector<16x32xf32>
      %131 = tpu.matmul %129, %130, %cst_77 {dimension_numbers = #tpu.dot_dimension_numbers<[1], [0], [0], [1], [0, 0, 1, 1], [], []>} : vector<16x24xf32>, vector<24x32xf32>, vector<16x32xf32> -> vector<16x32xf32>
      %cst_78 = arith.constant 0.000000e+00 : f32
      %132 = vector.broadcast %cst_78 : f32 to vector<16x32xf32>
      %133 = arith.cmpf ogt, %131, %132 : vector<16x32xf32>
      %134 = vector.broadcast %0 : vector<1x1xf32> to vector<16x32xf32>
      %135 = arith.mulf %134, %131 : vector<16x32xf32>
      %136 = arith.select %133, %131, %135 : vector<16x32xi1>, vector<16x32xf32>
      %c0_79 = arith.constant 0 : index
      %c0_80 = arith.constant 0 : index
      %137 = vector.load %arg19[%c0_79, %c0_80] : memref<16x32xf32, #tpu.memory_space<vmem>>, vector<16x32xf32>
      tpu.vector_store %arg19[%c0_79, %c0_80], %136 {strides = array<i32>} : memref<16x32xf32, #tpu.memory_space<vmem>>, vector<16x32xf32>,
    } else {
    }
    %c0_5 = arith.constant 0 : index
    %c0_6 = arith.constant 0 : index
    %6 = vector.load %arg19[%c0_5, %c0_6] : memref<16x32xf32, #tpu.memory_space<vmem>>, vector<16x32xf32>
    %c0_7 = arith.constant 0 : index
    %c0_8 = arith.constant 0 : index
    %7 = vector.load %arg3[%c0_7, %c0_8] : memref<40x16xf32, #tpu.memory_space<vmem>>, vector<40x16xf32>
    %c0_9 = arith.constant 0 : index
    %c0_10 = arith.constant 0 : index
    %8 = vector.load %arg4[%c0_9, %c0_10] : memref<40x16xf32, #tpu.memory_space<vmem>>, vector<40x16xf32>
    %c0_11 = arith.constant 0 : index
    %c0_12 = arith.constant 0 : index
    %c0_13 = arith.constant 0 : index
    %9 = vector.load %arg9[%c0_11, %c0_12, %c0_13] : memref<1x32x128xf32, #tpu.memory_space<vmem>>, vector<1x32x128xf32>
    %10 = vector.shape_cast %9 : vector<1x32x128xf32> to vector<32x128xf32>
    %cst = arith.constant dense<0.000000e+00> : vector<16x128xf32>
    %11 = tpu.matmul %6, %10, %cst {dimension_numbers = #tpu.dot_dimension_numbers<[1], [0], [0], [1], [0, 0, 1, 1], [], []>} : vector<16x32xf32>, vector<32x128xf32>, vector<16x128xf32> -> vector<16x128xf32>
    %c0_14 = arith.constant 0 : index
    %c0_15 = arith.constant 0 : index
    %c0_16 = arith.constant 0 : index
    %12 = vector.load %arg10[%c0_14, %c0_15, %c0_16] : memref<1x1x128xf32, #tpu.memory_space<vmem>>, vector<1x1x128xf32>
    %13 = vector.shape_cast %12 : vector<1x1x128xf32> to vector<1x128xf32>
    %14 = vector.broadcast %13 : vector<1x128xf32> to vector<16x128xf32>
    %15 = arith.addf %11, %14 : vector<16x128xf32>
    %cst_17 = arith.constant 0.000000e+00 : f32
    %16 = vector.broadcast %cst_17 : f32 to vector<16x128xf32>
    %17 = arith.cmpf ogt, %15, %16 : vector<16x128xf32>
    %18 = vector.broadcast %2 : vector<1x1xf32> to vector<16x128xf32>
    %19 = arith.mulf %18, %15 : vector<16x128xf32>
    %20 = arith.select %17, %15, %19 : vector<16x128xi1>, vector<16x128xf32>
    %c0_18 = arith.constant 0 : index
    %c0_19 = arith.constant 0 : index
    %21 = vector.load %arg5[%c0_18, %c0_19] : memref<40x8xf32, #tpu.memory_space<vmem>>, vector<40x8xf32>
    %c0_20 = arith.constant 0 : index
    %c0_21 = arith.constant 0 : index
    %c0_22 = arith.constant 0 : index
    %22 = vector.load %arg14[%c0_20, %c0_21, %c0_22] : memref<1x8x128xf32, #tpu.memory_space<vmem>>, vector<1x8x128xf32>
    %23 = vector.shape_cast %22 : vector<1x8x128xf32> to vector<8x128xf32>
    %cst_23 = arith.constant dense<0.000000e+00> : vector<40x128xf32>
    %24 = tpu.matmul %21, %23, %cst_23 {dimension_numbers = #tpu.dot_dimension_numbers<[1], [0], [0], [1], [0, 0, 1, 1], [], []>} : vector<40x8xf32>, vector<8x128xf32>, vector<40x128xf32> -> vector<40x128xf32>
    %c0_24 = arith.constant 0 : index
    %c0_25 = arith.constant 0 : index
    %c0_26 = arith.constant 0 : index
    %25 = vector.load %arg15[%c0_24, %c0_25, %c0_26] : memref<1x1x128xf32, #tpu.memory_space<vmem>>, vector<1x1x128xf32>
    %26 = vector.shape_cast %25 : vector<1x1x128xf32> to vector<1x128xf32>
    %27 = vector.broadcast %26 : vector<1x128xf32> to vector<40x128xf32>
    %28 = arith.addf %24, %27 : vector<40x128xf32>
    %cst_27 = arith.constant 0.000000e+00 : f32
    %29 = vector.broadcast %cst_27 : f32 to vector<40x128xf32>
    %30 = arith.cmpf ogt, %28, %29 : vector<40x128xf32>
    %31 = vector.broadcast %2 : vector<1x1xf32> to vector<40x128xf32>
    %32 = arith.mulf %31, %28 : vector<40x128xf32>
    %33 = arith.select %30, %28, %32 : vector<40x128xi1>, vector<40x128xf32>
    %cst_28 = arith.constant dense<0.000000e+00> : vector<40x128xf32>
    %34 = tpu.matmul %7, %20, %cst_28 {dimension_numbers = #tpu.dot_dimension_numbers<[1], [0], [0], [1], [0, 0, 1, 1], [], []>} : vector<40x16xf32>, vector<16x128xf32>, vector<40x128xf32> -> vector<40x128xf32>
    %35 = arith.addf %34, %33 : vector<40x128xf32>
    %cst_29 = arith.constant dense<0.000000e+00> : vector<40x128xf32>
    %36 = tpu.matmul %8, %20, %cst_29 {dimension_numbers = #tpu.dot_dimension_numbers<[1], [0], [0], [1], [0, 0, 1, 1], [], []>} : vector<40x16xf32>, vector<16x128xf32>, vector<40x128xf32> -> vector<40x128xf32>
    %c0_30 = arith.constant 0 : index
    %c0_31 = arith.constant 0 : index
    %c0_32 = arith.constant 0 : index
    %37 = vector.load %arg11[%c0_30, %c0_31, %c0_32] : memref<1x128x4xf32, #tpu.memory_space<vmem>>, vector<1x128x4xf32>
    %38 = vector.shape_cast %37 : vector<1x128x4xf32> to vector<128x4xf32>
    %cst_33 = arith.constant dense<0.000000e+00> : vector<40x4xf32>
    %39 = tpu.matmul %36, %38, %cst_33 {dimension_numbers = #tpu.dot_dimension_numbers<[1], [0], [0], [1], [0, 0, 1, 1], [], []>} : vector<40x128xf32>, vector<128x4xf32>, vector<40x4xf32> -> vector<40x4xf32>
    %c0_34 = arith.constant 0 : index
    %c0_35 = arith.constant 0 : index
    %c0_36 = arith.constant 0 : index
    %40 = vector.load %arg12[%c0_34, %c0_35, %c0_36] : memref<1x128x4xf32, #tpu.memory_space<vmem>>, vector<1x128x4xf32>
    %41 = vector.shape_cast %40 : vector<1x128x4xf32> to vector<128x4xf32>
    %cst_37 = arith.constant dense<0.000000e+00> : vector<40x4xf32>
    %42 = tpu.matmul %35, %41, %cst_37 {dimension_numbers = #tpu.dot_dimension_numbers<[1], [0], [0], [1], [0, 0, 1, 1], [], []>} : vector<40x128xf32>, vector<128x4xf32>, vector<40x4xf32> -> vector<40x4xf32>
    %43 = arith.addf %39, %42 : vector<40x4xf32>
    %cst_38 = arith.constant 0.000000e+00 : f32
    %44 = vector.broadcast %cst_38 : f32 to vector<40x4xf32>
    %45 = arith.cmpf ogt, %43, %44 : vector<40x4xf32>
    %46 = vector.broadcast %2 : vector<1x1xf32> to vector<40x4xf32>
    %47 = arith.mulf %46, %43 : vector<40x4xf32>
    %48 = arith.select %45, %43, %47 : vector<40x4xi1>, vector<40x4xf32>
    %cst_39 = arith.constant 1.000000e+00 : f32
    %49 = vector.broadcast %cst_39 : f32 to vector<40x16xf32>
    %50 = arith.subf %7, %49 : vector<40x16xf32>
    %cst_40 = arith.constant 1.000000e+30 : f32
    %51 = vector.broadcast %cst_40 : f32 to vector<40x16xf32>
    %52 = arith.mulf %50, %51 : vector<40x16xf32>
    %53 = vector.extract_strided_slice %48 {offsets = [0, 0], sizes = [40, 1], strides = [1, 1]} : vector<40x4xf32> to vector<40x1xf32>
    %54 = vector.broadcast %53 : vector<40x1xf32> to vector<40x16xf32>
    %55 = arith.mulf %54, %7 : vector<40x16xf32>
    %56 = arith.addf %55, %52 : vector<40x16xf32>
    %cst_41 = arith.constant dense<0xFF800000> : vector<16xf32>
    %57 = vector.multi_reduction <maximumf>, %56, %cst_41 [0] : vector<40x16xf32> to vector<16xf32>
    %58 = vector.shape_cast %57 : vector<16xf32> to vector<1x16xf32>
    %59 = vector.extract_strided_slice %48 {offsets = [0, 1], sizes = [40, 1], strides = [1, 1]} : vector<40x4xf32> to vector<40x1xf32>
    %60 = vector.broadcast %59 : vector<40x1xf32> to vector<40x16xf32>
    %61 = arith.mulf %60, %7 : vector<40x16xf32>
    %62 = arith.addf %61, %52 : vector<40x16xf32>
    %cst_42 = arith.constant dense<0xFF800000> : vector<16xf32>
    %63 = vector.multi_reduction <maximumf>, %62, %cst_42 [0] : vector<40x16xf32> to vector<16xf32>
    %64 = vector.shape_cast %63 : vector<16xf32> to vector<1x16xf32>
    %65 = vector.extract_strided_slice %48 {offsets = [0, 2], sizes = [40, 1], strides = [1, 1]} : vector<40x4xf32> to vector<40x1xf32>
    %66 = vector.broadcast %65 : vector<40x1xf32> to vector<40x16xf32>
    %67 = arith.mulf %66, %7 : vector<40x16xf32>
    %68 = arith.addf %67, %52 : vector<40x16xf32>
    %cst_43 = arith.constant dense<0xFF800000> : vector<16xf32>
    %69 = vector.multi_reduction <maximumf>, %68, %cst_43 [0] : vector<40x16xf32> to vector<16xf32>
    %70 = vector.shape_cast %69 : vector<16xf32> to vector<1x16xf32>
    %71 = vector.extract_strided_slice %48 {offsets = [0, 3], sizes = [40, 1], strides = [1, 1]} : vector<40x4xf32> to vector<40x1xf32>
    %72 = vector.broadcast %71 : vector<40x1xf32> to vector<40x16xf32>
    %73 = arith.mulf %72, %7 : vector<40x16xf32>
    %74 = arith.addf %73, %52 : vector<40x16xf32>
    %cst_44 = arith.constant dense<0xFF800000> : vector<16xf32>
    %75 = vector.multi_reduction <maximumf>, %74, %cst_44 [0] : vector<40x16xf32> to vector<16xf32>
    %76 = vector.shape_cast %75 : vector<16xf32> to vector<1x16xf32>
    %77 = tpu.concatenate %58, %64, %70, %76 in 0 : vector<1x16xf32>, vector<1x16xf32>, vector<1x16xf32>, vector<1x16xf32> -> vector<4x16xf32>
    %cst_45 = arith.constant dense<0.000000e+00> : vector<40x4xf32>
    %78 = tpu.matmul %7, %77, %cst_45 {dimension_numbers = #tpu.dot_dimension_numbers<[1], [1], [0], [0], [0, 0, 1, 0], [], []>} : vector<40x16xf32>, vector<4x16xf32>, vector<40x4xf32> -> vector<40x4xf32>
    %79 = arith.subf %48, %78 : vector<40x4xf32>
    %80 = math.exp %79 : vector<40x4xf32>
    %cst_46 = arith.constant dense<0.000000e+00> : vector<16x4xf32>
    %81 = tpu.matmul %7, %80, %cst_46 {dimension_numbers = #tpu.dot_dimension_numbers<[0], [0], [1], [1], [0, 1, 1, 1], [], []>} : vector<40x16xf32>, vector<40x4xf32>, vector<16x4xf32> -> vector<16x4xf32>
    %cst_47 = arith.constant dense<0.000000e+00> : vector<40x4xf32>
    %82 = tpu.matmul %7, %81, %cst_47 {dimension_numbers = #tpu.dot_dimension_numbers<[1], [0], [0], [1], [0, 0, 1, 1], [], []>} : vector<40x16xf32>, vector<16x4xf32>, vector<40x4xf32> -> vector<40x4xf32>
    %cst_48 = arith.constant 1.000000e-16 : f32
    %83 = vector.broadcast %cst_48 : f32 to vector<40x4xf32>
    %84 = arith.addf %82, %83 : vector<40x4xf32>
    %85 = tpu.reciprocal %84 {approx = true} : vector<40x4xf32> -> vector<40x4xf32>
    %86 = arith.mulf %80, %85 : vector<40x4xf32>
    %c0_49 = arith.constant 0 : index
    %c0_50 = arith.constant 0 : index
    %87 = vector.load %arg6[%c0_49, %c0_50] : memref<4x128xf32, #tpu.memory_space<vmem>>, vector<4x128xf32>
    %cst_51 = arith.constant dense<0.000000e+00> : vector<40x128xf32>
    %88 = tpu.matmul %86, %87, %cst_51 {dimension_numbers = #tpu.dot_dimension_numbers<[1], [0], [0], [1], [0, 0, 1, 1], [], []>} : vector<40x4xf32>, vector<4x128xf32>, vector<40x128xf32> -> vector<40x128xf32>
    %89 = arith.mulf %35, %88 : vector<40x128xf32>
    %cst_52 = arith.constant dense<0.000000e+00> : vector<16x128xf32>
    %90 = tpu.matmul %8, %89, %cst_52 {dimension_numbers = #tpu.dot_dimension_numbers<[0], [0], [1], [1], [0, 1, 1, 1], [], []>} : vector<40x16xf32>, vector<40x128xf32>, vector<16x128xf32> -> vector<16x128xf32>
    %c0_53 = arith.constant 0 : index
    %c0_54 = arith.constant 0 : index
    %91 = vector.load %arg7[%c0_53, %c0_54] : memref<128x32xf32, #tpu.memory_space<vmem>>, vector<128x32xf32>
    %cst_55 = arith.constant dense<0.000000e+00> : vector<16x32xf32>
    %92 = tpu.matmul %90, %91, %cst_55 {dimension_numbers = #tpu.dot_dimension_numbers<[1], [0], [0], [1], [0, 0, 1, 1], [], []>} : vector<16x128xf32>, vector<128x32xf32>, vector<16x32xf32> -> vector<16x32xf32>
    %c0_56 = arith.constant 0 : index
    %c0_57 = arith.constant 0 : index
    %c0_58 = arith.constant 0 : index
    %93 = vector.load %arg13[%c0_56, %c0_57, %c0_58] : memref<1x1x32xf32, #tpu.memory_space<vmem>>, vector<1x1x32xf32>
    %94 = vector.shape_cast %93 : vector<1x1x32xf32> to vector<1x32xf32>
    %95 = vector.broadcast %94 : vector<1x32xf32> to vector<16x32xf32>
    %96 = arith.addf %92, %95 : vector<16x32xf32>
    %cst_59 = arith.constant dense<0.000000e+00> : vector<16xf32>
    %97 = vector.multi_reduction <add>, %96, %cst_59 [1] : vector<16x32xf32> to vector<16xf32>
    %98 = vector.shape_cast %97 : vector<16xf32> to vector<16x1xf32>
    %cst_60 = arith.constant 3.200000e+01 : f32
    %99 = vector.broadcast %cst_60 : f32 to vector<16x1xf32>
    %100 = arith.divf %98, %99 : vector<16x1xf32>
    %101 = vector.broadcast %100 : vector<16x1xf32> to vector<16x32xf32>
    %102 = arith.subf %96, %101 : vector<16x32xf32>
    %103 = arith.mulf %102, %102 : vector<16x32xf32>
    %cst_61 = arith.constant dense<0.000000e+00> : vector<16xf32>
    %104 = vector.multi_reduction <add>, %103, %cst_61 [1] : vector<16x32xf32> to vector<16xf32>
    %105 = vector.shape_cast %104 : vector<16xf32> to vector<16x1xf32>
    %cst_62 = arith.constant 3.200000e+01 : f32
    %106 = vector.broadcast %cst_62 : f32 to vector<16x1xf32>
    %107 = arith.divf %105, %106 : vector<16x1xf32>
    %108 = vector.broadcast %100 : vector<16x1xf32> to vector<16x32xf32>
    %109 = arith.subf %96, %108 : vector<16x32xf32>
    %cst_63 = arith.constant 9.99999974E-6 : f32
    %110 = vector.broadcast %cst_63 : f32 to vector<16x1xf32>
    %111 = arith.addf %107, %110 : vector<16x1xf32>
    %112 = math.rsqrt %111 : vector<16x1xf32>
    %113 = vector.broadcast %112 : vector<16x1xf32> to vector<16x32xf32>
    %114 = arith.mulf %109, %113 : vector<16x32xf32>
    %c0_64 = arith.constant 0 : index
    %c0_65 = arith.constant 0 : index
    %c0_66 = arith.constant 0 : index
    %115 = vector.load %arg16[%c0_64, %c0_65, %c0_66] : memref<1x1x32xf32, #tpu.memory_space<vmem>>, vector<1x1x32xf32>
    %116 = vector.shape_cast %115 : vector<1x1x32xf32> to vector<1x32xf32>
    %117 = vector.broadcast %116 : vector<1x32xf32> to vector<16x32xf32>
    %118 = arith.mulf %114, %117 : vector<16x32xf32>
    %c0_67 = arith.constant 0 : index
    %c0_68 = arith.constant 0 : index
    %c0_69 = arith.constant 0 : index
    %119 = vector.load %arg17[%c0_67, %c0_68, %c0_69] : memref<1x1x32xf32, #tpu.memory_space<vmem>>, vector<1x1x32xf32>
    %120 = vector.shape_cast %119 : vector<1x1x32xf32> to vector<1x32xf32>
    %121 = vector.broadcast %120 : vector<1x32xf32> to vector<16x32xf32>
    %122 = arith.addf %118, %121 : vector<16x32xf32>
    %c1_i32 = arith.constant 1 : i32
    %123 = arith.cmpi ne, %arg0, %c1_i32 : i32
    %124 = arith.extui %123 : i1 to i32
    %c0_i32_70 = arith.constant 0 : i32
    %125 = arith.cmpi ne, %124, %c0_i32_70 : i32
    scf.if %125 {
      %cst_73 = arith.constant 0.000000e+00 : f32
      %129 = vector.broadcast %cst_73 : f32 to vector<16x32xf32>
      %130 = arith.cmpf ogt, %122, %129 : vector<16x32xf32>
      %131 = vector.broadcast %0 : vector<1x1xf32> to vector<16x32xf32>
      %132 = arith.mulf %131, %122 : vector<16x32xf32>
      %133 = arith.select %130, %122, %132 : vector<16x32xi1>, vector<16x32xf32>
      %c0_74 = arith.constant 0 : index
      %c0_75 = arith.constant 0 : index
      %134 = vector.load %arg19[%c0_74, %c0_75] : memref<16x32xf32, #tpu.memory_space<vmem>>, vector<16x32xf32>
      tpu.vector_store %arg19[%c0_74, %c0_75], %133 {strides = array<i32>} : memref<16x32xf32, #tpu.memory_space<vmem>>, vector<16x32xf32>,
    } else {
    }
    %c1_i32_71 = arith.constant 1 : i32
    %126 = arith.cmpi eq, %arg0, %c1_i32_71 : i32
    %127 = arith.extui %126 : i1 to i32
    %c0_i32_72 = arith.constant 0 : i32
    %128 = arith.cmpi ne, %127, %c0_i32_72 : i32
    scf.if %128 {
      %c0_73 = arith.constant 0 : index
      %c0_74 = arith.constant 0 : index
      %129 = vector.load %arg19[%c0_73, %c0_74] : memref<16x32xf32, #tpu.memory_space<vmem>>, vector<16x32xf32>
      tpu.vector_store %arg19[%c0_73, %c0_74], %122 {strides = array<i32>} : memref<16x32xf32, #tpu.memory_space<vmem>>, vector<16x32xf32>,
    } else {
    }
    return
  }
  func.func @transform_0(%arg0: i32) -> (i32, i32) {
    %c0_i32 = arith.constant 0 : i32
    %c0_i32_0 = arith.constant 0 : i32
    %c0_i32_1 = arith.constant 0 : i32
    return %c0_i32, %c0_i32_0 : i32, i32
  }
  func.func @transform_1(%arg0: i32) -> (i32, i32) {
    %c0_i32 = arith.constant 0 : i32
    %c0_i32_0 = arith.constant 0 : i32
    %c0_i32_1 = arith.constant 0 : i32
    return %c0_i32, %c0_i32_0 : i32, i32
  }
  func.func @transform_2(%arg0: i32) -> (i32, i32) {
    %c0_i32 = arith.constant 0 : i32
    %c0_i32_0 = arith.constant 0 : i32
    %c0_i32_1 = arith.constant 0 : i32
    return %c0_i32, %c0_i32_0 : i32, i32
  }
  func.func @transform_3(%arg0: i32) -> (i32, i32) {
    %c0_i32 = arith.constant 0 : i32
    %c0_i32_0 = arith.constant 0 : i32
    %c0_i32_1 = arith.constant 0 : i32
    return %c0_i32, %c0_i32_0 : i32, i32
  }
  func.func @transform_4(%arg0: i32) -> (i32, i32) {
    %c0_i32 = arith.constant 0 : i32
    %c0_i32_0 = arith.constant 0 : i32
    %c0_i32_1 = arith.constant 0 : i32
    return %c0_i32, %c0_i32_0 : i32, i32
  }
  func.func @transform_5(%arg0: i32) -> (i32, i32) {
    %c0_i32 = arith.constant 0 : i32
    %c0_i32_0 = arith.constant 0 : i32
    %c0_i32_1 = arith.constant 0 : i32
    return %c0_i32, %c0_i32_0 : i32, i32
  }
  func.func @transform_6(%arg0: i32) -> (i32, i32) {
    %c0_i32 = arith.constant 0 : i32
    %c0_i32_0 = arith.constant 0 : i32
    %c0_i32_1 = arith.constant 0 : i32
    return %c0_i32, %c0_i32_0 : i32, i32
  }
  func.func @transform_7(%arg0: i32) -> (i32, i32) {
    %c0_i32 = arith.constant 0 : i32
    %c0_i32_0 = arith.constant 0 : i32
    %c0_i32_1 = arith.constant 0 : i32
    return %c0_i32, %c0_i32_0 : i32, i32
  }
  func.func @transform_8(%arg0: i32) -> (i32, i32, i32) {
    %c0_i32 = arith.constant 0 : i32
    %c0_i32_0 = arith.constant 0 : i32
    %c0_i32_1 = arith.constant 0 : i32
    return %arg0, %c0_i32, %c0_i32_0 : i32, i32, i32
  }
  func.func @transform_9(%arg0: i32) -> (i32, i32, i32) {
    %c0_i32 = arith.constant 0 : i32
    %c0_i32_0 = arith.constant 0 : i32
    %c0_i32_1 = arith.constant 0 : i32
    return %arg0, %c0_i32, %c0_i32_0 : i32, i32, i32
  }
  func.func @transform_10(%arg0: i32) -> (i32, i32, i32) {
    %c0_i32 = arith.constant 0 : i32
    %c0_i32_0 = arith.constant 0 : i32
    %c0_i32_1 = arith.constant 0 : i32
    return %arg0, %c0_i32, %c0_i32_0 : i32, i32, i32
  }
  func.func @transform_11(%arg0: i32) -> (i32, i32, i32) {
    %c0_i32 = arith.constant 0 : i32
    %c0_i32_0 = arith.constant 0 : i32
    %c0_i32_1 = arith.constant 0 : i32
    return %arg0, %c0_i32, %c0_i32_0 : i32, i32, i32
  }
  func.func @transform_12(%arg0: i32) -> (i32, i32, i32) {
    %c0_i32 = arith.constant 0 : i32
    %c0_i32_0 = arith.constant 0 : i32
    %c0_i32_1 = arith.constant 0 : i32
    return %arg0, %c0_i32, %c0_i32_0 : i32, i32, i32
  }
  func.func @transform_13(%arg0: i32) -> (i32, i32, i32) {
    %c0_i32 = arith.constant 0 : i32
    %c0_i32_0 = arith.constant 0 : i32
    %c0_i32_1 = arith.constant 0 : i32
    return %arg0, %c0_i32, %c0_i32_0 : i32, i32, i32
  }
  func.func @transform_14(%arg0: i32) -> (i32, i32, i32) {
    %c0_i32 = arith.constant 0 : i32
    %c0_i32_0 = arith.constant 0 : i32
    %c0_i32_1 = arith.constant 0 : i32
    return %arg0, %c0_i32, %c0_i32_0 : i32, i32, i32
  }
  func.func @transform_15(%arg0: i32) -> (i32, i32, i32) {
    %c0_i32 = arith.constant 0 : i32
    %c0_i32_0 = arith.constant 0 : i32
    %c0_i32_1 = arith.constant 0 : i32
    return %arg0, %c0_i32, %c0_i32_0 : i32, i32, i32
  }
  func.func @transform_16(%arg0: i32) -> (i32, i32, i32) {
    %c0_i32 = arith.constant 0 : i32
    %c0_i32_0 = arith.constant 0 : i32
    %c0_i32_1 = arith.constant 0 : i32
    return %arg0, %c0_i32, %c0_i32_0 : i32, i32, i32
  }
  func.func @transform_17(%arg0: i32) -> (i32, i32, i32) {
    %c0_i32 = arith.constant 0 : i32
    %c0_i32_0 = arith.constant 0 : i32
    %c0_i32_1 = arith.constant 0 : i32
    return %arg0, %c0_i32, %c0_i32_0 : i32, i32, i32
  }
  func.func @transform_18(%arg0: i32) -> (i32, i32) {
    %c0_i32 = arith.constant 0 : i32
    %c0_i32_0 = arith.constant 0 : i32
    %c0_i32_1 = arith.constant 0 : i32
    return %c0_i32, %c0_i32_0 : i32, i32
  }
}

</mosaic_0001>

<llo_original>
// kernel: tpu_custom_call.1
$region0: #{tpu_custom_call.1}
  #allocation0 [shape = 'u32[]', space=smem, size = 0x4, offset = 0x4, fixed_abs, tag = 'smem constant byte address 0x4 - core index']
  #allocation1 [shape = 'u32[144,128]{1,0:T(1,128)}', space=vmem, size = 0x12000, scoped, tag = 'internal scratch']
  #allocation2 [shape = 'f32[1,1]{1,0:T(1,128)S(1)}', space=vmem, size = 0x200, scoped, tag = 'scoped memory for tpu_custom_call.1']
  %s0 = inlined_call_operand.vmem [shape: f32[16,24], index: 0, kind: input, shape index: {}]
  %s1 = inlined_call_operand.vmem [shape: f32[24,32], index: 1, kind: input, shape index: {}]
  %s2 = inlined_call_operand.vmem [shape: f32[40,16], index: 2, kind: input, shape index: {}]
  %s3 = inlined_call_operand.vmem [shape: f32[40,16], index: 3, kind: input, shape index: {}]
  %s4 = inlined_call_operand.vmem [shape: f32[40,8], index: 4, kind: input, shape index: {}]
  %s5 = inlined_call_operand.vmem [shape: f32[4,128], index: 5, kind: input, shape index: {}]
  %s6 = inlined_call_operand.vmem [shape: f32[128,32], index: 6, kind: input, shape index: {}]
  %s7 = inlined_call_operand.<no memory space> [shape: f32[1,1], index: 7, kind: input, shape index: {}]
  %s8 = inlined_call_operand.vmem [shape: f32[2,32,128], index: 8, kind: input, shape index: {}]
  %s9 = inlined_call_operand.vmem [shape: f32[2,1,128], index: 9, kind: input, shape index: {}]
  %s10 = inlined_call_operand.vmem [shape: f32[2,128,4], index: 10, kind: input, shape index: {}]
  %s11 = inlined_call_operand.vmem [shape: f32[2,128,4], index: 11, kind: input, shape index: {}]
  %s12 = inlined_call_operand.vmem [shape: f32[2,1,32], index: 12, kind: input, shape index: {}]
  %s13 = inlined_call_operand.vmem [shape: f32[2,8,128], index: 13, kind: input, shape index: {}]
  %s14 = inlined_call_operand.vmem [shape: f32[2,1,128], index: 14, kind: input, shape index: {}]
  %s15 = inlined_call_operand.vmem [shape: f32[2,1,32], index: 15, kind: input, shape index: {}]
  %s16 = inlined_call_operand.vmem [shape: f32[2,1,32], index: 16, kind: input, shape index: {}]
  %s17 = inlined_call_operand.vmem [shape: f32[2,1,1], index: 17, kind: input, shape index: {}]
  %s18 = inlined_call_operand.hbm [shape: f32[16,32], index: 18, kind: output, shape index: {}]
  %s19 = sld [smem:[#allocation0]]
  $region117: #{tpu_custom_call.1} parent=0
    _
  %s21 = ssub.s32 1, %s19
  %s22 = scalar_select 0, %s21, %s19
  %v23 = vstv %s7
  %24 = vst [vmem:[#allocation2] sm:$0x1] %v23
  $region1: #{tpu_custom_call.1} parent=0
    #allocation3 [shape = 'u8[8192]{0}', space=vmem, size = 0x2000, scoped, tag = 'output window, operand 0, single buffered']
    #allocation4 [shape = 's32[2]{0}', space=sflag, size = 0x8, scoped, tag = 'scoped memory for tpu_custom_call.1']
    %25 = vsyncpa [#allocation4], 0
    loop: start=0, step=1, limit=4
    $region2: #{tpu_custom_call.1} parent=1 // loop_pre_header
      _
    $region3: #{tpu_custom_call.1} parent=1 // loop_header
      %s27 = sphi 0, %s31
      %p28 = scmp.ge.s32.totalorder %s27, 4
      %s35 = sphi 0, %s35
      %s37 = sphi 0, %s35
      %s38 = sphi 0, %s37
      %s52 = sphi 0, %s38
      %s56 = sphi 0, %s56
      %s58 = sphi 0, %s56
      %s59 = sphi 0, %s58
      %s73 = sphi 0, %s59
      %s77 = sphi 0, %s77
      %s79 = sphi 0, %s77
      %s80 = sphi 0, %s79
      %s94 = sphi 0, %s80
      %s98 = sphi 0, %s98
      %s100 = sphi 0, %s98
      %s101 = sphi 0, %s100
      %s115 = sphi 0, %s101
      %s119 = sphi 0, %s119
      %s121 = sphi 0, %s119
      %s122 = sphi 0, %s121
      %s136 = sphi 0, %s122
      %s140 = sphi 0, %s140
      %s142 = sphi 0, %s140
      %s143 = sphi 0, %s142
      %s157 = sphi 0, %s143
      %s161 = sphi 0, %s161
      %s163 = sphi 0, %s161
      %s164 = sphi 0, %s163
      %s178 = sphi 0, %s164
      %s182 = sphi 0, %s182
      %s184 = sphi 0, %s182
      %s185 = sphi 0, %s184
      %s199 = sphi 0, %s185
      %s205 = sphi 0, %s207
      %s208 = sphi 0, %s205
      %s209 = sphi 0, %s208
      %s225 = sphi 0, %s209
      %s231 = sphi 0, %s233
      %s234 = sphi 0, %s231
      %s235 = sphi 0, %s234
      %s251 = sphi 0, %s235
      %s257 = sphi 0, %s259
      %s260 = sphi 0, %s257
      %s261 = sphi 0, %s260
      %s277 = sphi 0, %s261
      %s283 = sphi 0, %s285
      %s286 = sphi 0, %s283
      %s287 = sphi 0, %s286
      %s303 = sphi 0, %s287
      %s309 = sphi 0, %s311
      %s312 = sphi 0, %s309
      %s313 = sphi 0, %s312
      %s329 = sphi 0, %s313
      %s335 = sphi 0, %s337
      %s338 = sphi 0, %s335
      %s339 = sphi 0, %s338
      %s355 = sphi 0, %s339
      %s361 = sphi 0, %s363
      %s364 = sphi 0, %s361
      %s365 = sphi 0, %s364
      %s381 = sphi 0, %s365
      %s387 = sphi 0, %s389
      %s390 = sphi 0, %s387
      %s391 = sphi 0, %s390
      %s407 = sphi 0, %s391
      %s413 = sphi 0, %s415
      %s416 = sphi 0, %s413
      %s417 = sphi 0, %s416
      %s433 = sphi 0, %s417
      %s439 = sphi 0, %s441
      %s442 = sphi 0, %s439
      %s443 = sphi 0, %s442
      %s459 = sphi 0, %s443
      %s463 = sphi 0, %s463
      %s465 = sphi 0, %s463
      %s466 = sphi 0, %s465
      %s480 = sphi 0, %s466
    $region4: #{tpu_custom_call.1} parent=1 // loop_header_branch
      %30 = sbr.rel (%p28) target = $region8
    $region5: #{tpu_custom_call.1} parent=1 // loop_body
      %s32 = ssub.s32 %s27, 1
      %s33 = ssub.s32 %s27, 2
      %s34 = sadd.s32 %s27, 1
      %s36 = sadd.s32 %s35, 1
      %p39 = scmp.eq.s32.totalorder %s27, 1
      %p40 = scmp.ne.s32.totalorder %s35, %s37
      %p41 = scmp.eq.s32.totalorder %s27, 0
      %p42 = por %p40, %p41
      %p43 = scmp.ne.s32.totalorder %s35, %s37
      %p44 = scmp.eq.s32.totalorder %s32, 1
      %p45 = por %p43, %p44
      %p46 = scmp.ne.s32.totalorder %s37, %s38
      %p47 = scmp.eq.s32.totalorder %s32, 0
      %p48 = por %p46, %p47
      %p49 = scmp.ne.s32.totalorder %s37, %s38
      %p50 = scmp.eq.s32.totalorder %s33, 1
      %p51 = por %p49, %p50
      %p53 = scmp.ne.s32.totalorder %s38, %s52
      %p54 = scmp.eq.s32.totalorder %s33, 0
      %p55 = por %p53, %p54
      %s57 = sadd.s32 %s56, 1
      %p60 = scmp.eq.s32.totalorder %s27, 1
      %p61 = scmp.ne.s32.totalorder %s56, %s58
      %p62 = scmp.eq.s32.totalorder %s27, 0
      %p63 = por %p61, %p62
      %p64 = scmp.ne.s32.totalorder %s56, %s58
      %p65 = scmp.eq.s32.totalorder %s32, 1
      %p66 = por %p64, %p65
      %p67 = scmp.ne.s32.totalorder %s58, %s59
      %p68 = scmp.eq.s32.totalorder %s32, 0
      %p69 = por %p67, %p68
      %p70 = scmp.ne.s32.totalorder %s58, %s59
      %p71 = scmp.eq.s32.totalorder %s33, 1
      %p72 = por %p70, %p71
      %p74 = scmp.ne.s32.totalorder %s59, %s73
      %p75 = scmp.eq.s32.totalorder %s33, 0
      %p76 = por %p74, %p75
      %s78 = sadd.s32 %s77, 1
      %p81 = scmp.eq.s32.totalorder %s27, 1
      %p82 = scmp.ne.s32.totalorder %s77, %s79
      %p83 = scmp.eq.s32.totalorder %s27, 0
      %p84 = por %p82, %p83
      %p85 = scmp.ne.s32.totalorder %s77, %s79
      %p86 = scmp.eq.s32.totalorder %s32, 1
      %p87 = por %p85, %p86
      %p88 = scmp.ne.s32.totalorder %s79, %s80
      %p89 = scmp.eq.s32.totalorder %s32, 0
      %p90 = por %p88, %p89
      %p91 = scmp.ne.s32.totalorder %s79, %s80
      %p92 = scmp.eq.s32.totalorder %s33, 1
      %p93 = por %p91, %p92
      %p95 = scmp.ne.s32.totalorder %s80, %s94
      %p96 = scmp.eq.s32.totalorder %s33, 0
      %p97 = por %p95, %p96
      %s99 = sadd.s32 %s98, 1
      %p102 = scmp.eq.s32.totalorder %s27, 1
      %p103 = scmp.ne.s32.totalorder %s98, %s100
      %p104 = scmp.eq.s32.totalorder %s27, 0
      %p105 = por %p103, %p104
      %p106 = scmp.ne.s32.totalorder %s98, %s100
      %p107 = scmp.eq.s32.totalorder %s32, 1
      %p108 = por %p106, %p107
      %p109 = scmp.ne.s32.totalorder %s100, %s101
      %p110 = scmp.eq.s32.totalorder %s32, 0
      %p111 = por %p109, %p110
      %p112 = scmp.ne.s32.totalorder %s100, %s101
      %p113 = scmp.eq.s32.totalorder %s33, 1
      %p114 = por %p112, %p113
      %p116 = scmp.ne.s32.totalorder %s101, %s115
      %p117 = scmp.eq.s32.totalorder %s33, 0
      %p118 = por %p116, %p117
      %s120 = sadd.s32 %s119, 1
      %p123 = scmp.eq.s32.totalorder %s27, 1
      %p124 = scmp.ne.s32.totalorder %s119, %s121
      %p125 = scmp.eq.s32.totalorder %s27, 0
      %p126 = por %p124, %p125
      %p127 = scmp.ne.s32.totalorder %s119, %s121
      %p128 = scmp.eq.s32.totalorder %s32, 1
      %p129 = por %p127, %p128
      %p130 = scmp.ne.s32.totalorder %s121, %s122
      %p131 = scmp.eq.s32.totalorder %s32, 0
      %p132 = por %p130, %p131
      %p133 = scmp.ne.s32.totalorder %s121, %s122
      %p134 = scmp.eq.s32.totalorder %s33, 1
      %p135 = por %p133, %p134
      %p137 = scmp.ne.s32.totalorder %s122, %s136
      %p138 = scmp.eq.s32.totalorder %s33, 0
      %p139 = por %p137, %p138
      %s141 = sadd.s32 %s140, 1
      %p144 = scmp.eq.s32.totalorder %s27, 1
      %p145 = scmp.ne.s32.totalorder %s140, %s142
      %p146 = scmp.eq.s32.totalorder %s27, 0
      %p147 = por %p145, %p146
      %p148 = scmp.ne.s32.totalorder %s140, %s142
      %p149 = scmp.eq.s32.totalorder %s32, 1
      %p150 = por %p148, %p149
      %p151 = scmp.ne.s32.totalorder %s142, %s143
      %p152 = scmp.eq.s32.totalorder %s32, 0
      %p153 = por %p151, %p152
      %p154 = scmp.ne.s32.totalorder %s142, %s143
      %p155 = scmp.eq.s32.totalorder %s33, 1
      %p156 = por %p154, %p155
      %p158 = scmp.ne.s32.totalorder %s143, %s157
      %p159 = scmp.eq.s32.totalorder %s33, 0
      %p160 = por %p158, %p159
      %s162 = sadd.s32 %s161, 1
      %p165 = scmp.eq.s32.totalorder %s27, 1
      %p166 = scmp.ne.s32.totalorder %s161, %s163
      %p167 = scmp.eq.s32.totalorder %s27, 0
      %p168 = por %p166, %p167
      %p169 = scmp.ne.s32.totalorder %s161, %s163
      %p170 = scmp.eq.s32.totalorder %s32, 1
      %p171 = por %p169, %p170
      %p172 = scmp.ne.s32.totalorder %s163, %s164
      %p173 = scmp.eq.s32.totalorder %s32, 0
      %p174 = por %p172, %p173
      %p175 = scmp.ne.s32.totalorder %s163, %s164
      %p176 = scmp.eq.s32.totalorder %s33, 1
      %p177 = por %p175, %p176
      %p179 = scmp.ne.s32.totalorder %s164, %s178
      %p180 = scmp.eq.s32.totalorder %s33, 0
      %p181 = por %p179, %p180
      %s183 = sadd.s32 %s182, 1
      %p186 = scmp.eq.s32.totalorder %s27, 1
      %p187 = scmp.ne.s32.totalorder %s182, %s184
      %p188 = scmp.eq.s32.totalorder %s27, 0
      %p189 = por %p187, %p188
      %p190 = scmp.ne.s32.totalorder %s182, %s184
      %p191 = scmp.eq.s32.totalorder %s32, 1
      %p192 = por %p190, %p191
      %p193 = scmp.ne.s32.totalorder %s184, %s185
      %p194 = scmp.eq.s32.totalorder %s32, 0
      %p195 = por %p193, %p194
      %p196 = scmp.ne.s32.totalorder %s184, %s185
      %p197 = scmp.eq.s32.totalorder %s33, 1
      %p198 = por %p196, %p197
      %p200 = scmp.ne.s32.totalorder %s185, %s199
      %p201 = scmp.eq.s32.totalorder %s33, 0
      %p202 = por %p200, %p201
      %s203 = ssub.s32 %s27, %s34
      %p204 = scmp.eq.s32.totalorder %s203, 0
      %s206 = sadd.s32 %s205, 1
      %s207 = scalar_select %p204, %s205, %s206
      %p210 = pneg %p204
      %p211 = scmp.eq.s32.totalorder %s27, 1
      %p212 = por %p210, %p211
      %p213 = scmp.ne.s32.totalorder %s205, %s208
      %p214 = scmp.eq.s32.totalorder %s27, 0
      %p215 = por %p213, %p214
      %p216 = scmp.ne.s32.totalorder %s205, %s208
      %p217 = scmp.eq.s32.totalorder %s32, 1
      %p218 = por %p216, %p217
      %p219 = scmp.ne.s32.totalorder %s208, %s209
      %p220 = scmp.eq.s32.totalorder %s32, 0
      %p221 = por %p219, %p220
      %p222 = scmp.ne.s32.totalorder %s208, %s209
      %p223 = scmp.eq.s32.totalorder %s33, 1
      %p224 = por %p222, %p223
      %p226 = scmp.ne.s32.totalorder %s209, %s225
      %p227 = scmp.eq.s32.totalorder %s33, 0
      %p228 = por %p226, %p227
      %s229 = ssub.s32 %s27, %s34
      %p230 = scmp.eq.s32.totalorder %s229, 0
      %s232 = sadd.s32 %s231, 1
      %s233 = scalar_select %p230, %s231, %s232
      %p236 = pneg %p230
      %p237 = scmp.eq.s32.totalorder %s27, 1
      %p238 = por %p236, %p237
      %p239 = scmp.ne.s32.totalorder %s231, %s234
      %p240 = scmp.eq.s32.totalorder %s27, 0
      %p241 = por %p239, %p240
      %p242 = scmp.ne.s32.totalorder %s231, %s234
      %p243 = scmp.eq.s32.totalorder %s32, 1
      %p244 = por %p242, %p243
      %p245 = scmp.ne.s32.totalorder %s234, %s235
      %p246 = scmp.eq.s32.totalorder %s32, 0
      %p247 = por %p245, %p246
      %p248 = scmp.ne.s32.totalorder %s234, %s235
      %p249 = scmp.eq.s32.totalorder %s33, 1
      %p250 = por %p248, %p249
      %p252 = scmp.ne.s32.totalorder %s235, %s251
      %p253 = scmp.eq.s32.totalorder %s33, 0
      %p254 = por %p252, %p253
      %s255 = ssub.s32 %s27, %s34
      %p256 = scmp.eq.s32.totalorder %s255, 0
      %s258 = sadd.s32 %s257, 1
      %s259 = scalar_select %p256, %s257, %s258
      %p262 = pneg %p256
      %p263 = scmp.eq.s32.totalorder %s27, 1
      %p264 = por %p262, %p263
      %p265 = scmp.ne.s32.totalorder %s257, %s260
      %p266 = scmp.eq.s32.totalorder %s27, 0
      %p267 = por %p265, %p266
      %p268 = scmp.ne.s32.totalorder %s257, %s260
      %p269 = scmp.eq.s32.totalorder %s32, 1
      %p270 = por %p268, %p269
      %p271 = scmp.ne.s32.totalorder %s260, %s261
      %p272 = scmp.eq.s32.totalorder %s32, 0
      %p273 = por %p271, %p272
      %p274 = scmp.ne.s32.totalorder %s260, %s261
      %p275 = scmp.eq.s32.totalorder %s33, 1
      %p276 = por %p274, %p275
      %p278 = scmp.ne.s32.totalorder %s261, %s277
      %p279 = scmp.eq.s32.totalorder %s33, 0
      %p280 = por %p278, %p279
      %s281 = ssub.s32 %s27, %s34
      %p282 = scmp.eq.s32.totalorder %s281, 0
      %s284 = sadd.s32 %s283, 1
      %s285 = scalar_select %p282, %s283, %s284
      %p288 = pneg %p282
      %p289 = scmp.eq.s32.totalorder %s27, 1
      %p290 = por %p288, %p289
      %p291 = scmp.ne.s32.totalorder %s283, %s286
      %p292 = scmp.eq.s32.totalorder %s27, 0
      %p293 = por %p291, %p292
      %p294 = scmp.ne.s32.totalorder %s283, %s286
      %p295 = scmp.eq.s32.totalorder %s32, 1
      %p296 = por %p294, %p295
      %p297 = scmp.ne.s32.totalorder %s286, %s287
      %p298 = scmp.eq.s32.totalorder %s32, 0
      %p299 = por %p297, %p298
      %p300 = scmp.ne.s32.totalorder %s286, %s287
      %p301 = scmp.eq.s32.totalorder %s33, 1
      %p302 = por %p300, %p301
      %p304 = scmp.ne.s32.totalorder %s287, %s303
      %p305 = scmp.eq.s32.totalorder %s33, 0
      %p306 = por %p304, %p305
      %s307 = ssub.s32 %s27, %s34
      %p308 = scmp.eq.s32.totalorder %s307, 0
      %s310 = sadd.s32 %s309, 1
      %s311 = scalar_select %p308, %s309, %s310
      %p314 = pneg %p308
      %p315 = scmp.eq.s32.totalorder %s27, 1
      %p316 = por %p314, %p315
      %p317 = scmp.ne.s32.totalorder %s309, %s312
      %p318 = scmp.eq.s32.totalorder %s27, 0
      %p319 = por %p317, %p318
      %p320 = scmp.ne.s32.totalorder %s309, %s312
      %p321 = scmp.eq.s32.totalorder %s32, 1
      %p322 = por %p320, %p321
      %p323 = scmp.ne.s32.totalorder %s312, %s313
      %p324 = scmp.eq.s32.totalorder %s32, 0
      %p325 = por %p323, %p324
      %p326 = scmp.ne.s32.totalorder %s312, %s313
      %p327 = scmp.eq.s32.totalorder %s33, 1
      %p328 = por %p326, %p327
      %p330 = scmp.ne.s32.totalorder %s313, %s329
      %p331 = scmp.eq.s32.totalorder %s33, 0
      %p332 = por %p330, %p331
      %s333 = ssub.s32 %s27, %s34
      %p334 = scmp.eq.s32.totalorder %s333, 0
      %s336 = sadd.s32 %s335, 1
      %s337 = scalar_select %p334, %s335, %s336
      %p340 = pneg %p334
      %p341 = scmp.eq.s32.totalorder %s27, 1
      %p342 = por %p340, %p341
      %p343 = scmp.ne.s32.totalorder %s335, %s338
      %p344 = scmp.eq.s32.totalorder %s27, 0
      %p345 = por %p343, %p344
      %p346 = scmp.ne.s32.totalorder %s335, %s338
      %p347 = scmp.eq.s32.totalorder %s32, 1
      %p348 = por %p346, %p347
      %p349 = scmp.ne.s32.totalorder %s338, %s339
      %p350 = scmp.eq.s32.totalorder %s32, 0
      %p351 = por %p349, %p350
      %p352 = scmp.ne.s32.totalorder %s338, %s339
      %p353 = scmp.eq.s32.totalorder %s33, 1
      %p354 = por %p352, %p353
      %p356 = scmp.ne.s32.totalorder %s339, %s355
      %p357 = scmp.eq.s32.totalorder %s33, 0
      %p358 = por %p356, %p357
      %s359 = ssub.s32 %s27, %s34
      %p360 = scmp.eq.s32.totalorder %s359, 0
      %s362 = sadd.s32 %s361, 1
      %s363 = scalar_select %p360, %s361, %s362
      %p366 = pneg %p360
      %p367 = scmp.eq.s32.totalorder %s27, 1
      %p368 = por %p366, %p367
      %p369 = scmp.ne.s32.totalorder %s361, %s364
      %p370 = scmp.eq.s32.totalorder %s27, 0
      %p371 = por %p369, %p370
      %p372 = scmp.ne.s32.totalorder %s361, %s364
      %p373 = scmp.eq.s32.totalorder %s32, 1
      %p374 = por %p372, %p373
      %p375 = scmp.ne.s32.totalorder %s364, %s365
      %p376 = scmp.eq.s32.totalorder %s32, 0
      %p377 = por %p375, %p376
      %p378 = scmp.ne.s32.totalorder %s364, %s365
      %p379 = scmp.eq.s32.totalorder %s33, 1
      %p380 = por %p378, %p379
      %p382 = scmp.ne.s32.totalorder %s365, %s381
      %p383 = scmp.eq.s32.totalorder %s33, 0
      %p384 = por %p382, %p383
      %s385 = ssub.s32 %s27, %s34
      %p386 = scmp.eq.s32.totalorder %s385, 0
      %s388 = sadd.s32 %s387, 1
      %s389 = scalar_select %p386, %s387, %s388
      %p392 = pneg %p386
      %p393 = scmp.eq.s32.totalorder %s27, 1
      %p394 = por %p392, %p393
      %p395 = scmp.ne.s32.totalorder %s387, %s390
      %p396 = scmp.eq.s32.totalorder %s27, 0
      %p397 = por %p395, %p396
      %p398 = scmp.ne.s32.totalorder %s387, %s390
      %p399 = scmp.eq.s32.totalorder %s32, 1
      %p400 = por %p398, %p399
      %p401 = scmp.ne.s32.totalorder %s390, %s391
      %p402 = scmp.eq.s32.totalorder %s32, 0
      %p403 = por %p401, %p402
      %p404 = scmp.ne.s32.totalorder %s390, %s391
      %p405 = scmp.eq.s32.totalorder %s33, 1
      %p406 = por %p404, %p405
      %p408 = scmp.ne.s32.totalorder %s391, %s407
      %p409 = scmp.eq.s32.totalorder %s33, 0
      %p410 = por %p408, %p409
      %s411 = ssub.s32 %s27, %s34
      %p412 = scmp.eq.s32.totalorder %s411, 0
      %s414 = sadd.s32 %s413, 1
      %s415 = scalar_select %p412, %s413, %s414
      %p418 = pneg %p412
      %p419 = scmp.eq.s32.totalorder %s27, 1
      %p420 = por %p418, %p419
      %p421 = scmp.ne.s32.totalorder %s413, %s416
      %p422 = scmp.eq.s32.totalorder %s27, 0
      %p423 = por %p421, %p422
      %p424 = scmp.ne.s32.totalorder %s413, %s416
      %p425 = scmp.eq.s32.totalorder %s32, 1
      %p426 = por %p424, %p425
      %p427 = scmp.ne.s32.totalorder %s416, %s417
      %p428 = scmp.eq.s32.totalorder %s32, 0
      %p429 = por %p427, %p428
      %p430 = scmp.ne.s32.totalorder %s416, %s417
      %p431 = scmp.eq.s32.totalorder %s33, 1
      %p432 = por %p430, %p431
      %p434 = scmp.ne.s32.totalorder %s417, %s433
      %p435 = scmp.eq.s32.totalorder %s33, 0
      %p436 = por %p434, %p435
      %s437 = ssub.s32 %s27, %s34
      %p438 = scmp.eq.s32.totalorder %s437, 0
      %s440 = sadd.s32 %s439, 1
      %s441 = scalar_select %p438, %s439, %s440
      %p444 = pneg %p438
      %p445 = scmp.eq.s32.totalorder %s27, 1
      %p446 = por %p444, %p445
      %p447 = scmp.ne.s32.totalorder %s439, %s442
      %p448 = scmp.eq.s32.totalorder %s27, 0
      %p449 = por %p447, %p448
      %p450 = scmp.ne.s32.totalorder %s439, %s442
      %p451 = scmp.eq.s32.totalorder %s32, 1
      %p452 = por %p450, %p451
      %p453 = scmp.ne.s32.totalorder %s442, %s443
      %p454 = scmp.eq.s32.totalorder %s32, 0
      %p455 = por %p453, %p454
      %p456 = scmp.ne.s32.totalorder %s442, %s443
      %p457 = scmp.eq.s32.totalorder %s33, 1
      %p458 = por %p456, %p457
      %p460 = scmp.ne.s32.totalorder %s443, %s459
      %p461 = scmp.eq.s32.totalorder %s33, 0
      %p462 = por %p460, %p461
      %s464 = sadd.s32 %s463, 1
      %p467 = scmp.eq.s32.totalorder %s27, 1
      %p468 = scmp.ne.s32.totalorder %s463, %s465
      %p469 = scmp.eq.s32.totalorder %s27, 0
      %p470 = por %p468, %p469
      %p471 = scmp.ne.s32.totalorder %s463, %s465
      %p472 = scmp.eq.s32.totalorder %s32, 1
      %p473 = por %p471, %p472
      %p474 = scmp.ne.s32.totalorder %s465, %s466
      %p475 = scmp.eq.s32.totalorder %s32, 0
      %p476 = por %p474, %p475
      %p477 = scmp.ne.s32.totalorder %s465, %s466
      %p478 = scmp.eq.s32.totalorder %s33, 1
      %p479 = por %p477, %p478
      %p481 = scmp.ne.s32.totalorder %s466, %s480
      %p482 = scmp.eq.s32.totalorder %s33, 0
      %p483 = por %p481, %p482
      %p484 = scmp.le.s32.totalorder 1, %s27
      %p485 = scmp.lt.s32.totalorder %s27, 3
      %p486 = pnand %p484, %p485
      %p487 = pneg %p486
      // Predicated region
      $region9: #{tpu_custom_call.1} parent=5 // pred_check
        _
      $region10: #{tpu_custom_call.1} parent=5 // pred_check_branch
        %489 = sbr.rel (%p486) target = $region12
      $region11: #{tpu_custom_call.1} parent=5 // pred_region
        %s490 = ssub.s32 %s27, 1
        // Predicated region
        $region13: #{tpu_custom_call.1} parent=11 // pred_check
          %p491 = pneg %p48
        $region14: #{tpu_custom_call.1} parent=11 // pred_check_branch
          %493 = sbr.rel (%p491) target = $region16
        $region15: #{tpu_custom_call.1} parent=11 // pred_region
          _
        $region16: #{tpu_custom_call.1} parent=11 // pred_fallthru
          _
        // Predicated region
        $region17: #{tpu_custom_call.1} parent=11 // pred_check
          %p494 = pneg %p69
        $region18: #{tpu_custom_call.1} parent=11 // pred_check_branch
          %496 = sbr.rel (%p494) target = $region20
        $region19: #{tpu_custom_call.1} parent=11 // pred_region
          _
        $region20: #{tpu_custom_call.1} parent=11 // pred_fallthru
          _
        // Predicated region
        $region21: #{tpu_custom_call.1} parent=11 // pred_check
          %p497 = pneg %p90
        $region22: #{tpu_custom_call.1} parent=11 // pred_check_branch
          %499 = sbr.rel (%p497) target = $region24
        $region23: #{tpu_custom_call.1} parent=11 // pred_region
          _
        $region24: #{tpu_custom_call.1} parent=11 // pred_fallthru
          _
        // Predicated region
        $region25: #{tpu_custom_call.1} parent=11 // pred_check
          %p500 = pneg %p111
        $region26: #{tpu_custom_call.1} parent=11 // pred_check_branch
          %502 = sbr.rel (%p500) target = $region28
        $region27: #{tpu_custom_call.1} parent=11 // pred_region
          _
        $region28: #{tpu_custom_call.1} parent=11 // pred_fallthru
          _
        // Predicated region
        $region29: #{tpu_custom_call.1} parent=11 // pred_check
          %p503 = pneg %p132
        $region30: #{tpu_custom_call.1} parent=11 // pred_check_branch
          %505 = sbr.rel (%p503) target = $region32
        $region31: #{tpu_custom_call.1} parent=11 // pred_region
          _
        $region32: #{tpu_custom_call.1} parent=11 // pred_fallthru
          _
        // Predicated region
        $region33: #{tpu_custom_call.1} parent=11 // pred_check
          %p506 = pneg %p153
        $region34: #{tpu_custom_call.1} parent=11 // pred_check_branch
          %508 = sbr.rel (%p506) target = $region36
        $region35: #{tpu_custom_call.1} parent=11 // pred_region
          _
        $region36: #{tpu_custom_call.1} parent=11 // pred_fallthru
          _
        // Predicated region
        $region37: #{tpu_custom_call.1} parent=11 // pred_check
          %p509 = pneg %p174
        $region38: #{tpu_custom_call.1} parent=11 // pred_check_branch
          %511 = sbr.rel (%p509) target = $region40
        $region39: #{tpu_custom_call.1} parent=11 // pred_region
          _
        $region40: #{tpu_custom_call.1} parent=11 // pred_fallthru
          _
        // Predicated region
        $region41: #{tpu_custom_call.1} parent=11 // pred_check
          %p512 = pneg %p195
        $region42: #{tpu_custom_call.1} parent=11 // pred_check_branch
          %514 = sbr.rel (%p512) target = $region44
        $region43: #{tpu_custom_call.1} parent=11 // pred_region
          _
        $region44: #{tpu_custom_call.1} parent=11 // pred_fallthru
          _
      $region12: #{tpu_custom_call.1} parent=5 // pred_fallthru
        _
      %p515 = scmp.lt.s32.totalorder %s27, 2
      // Predicated region
      $region45: #{tpu_custom_call.1} parent=5 // pred_check
        %p516 = pneg %p515
      $region46: #{tpu_custom_call.1} parent=5 // pred_check_branch
        %518 = sbr.rel (%p516) target = $region48
      $region47: #{tpu_custom_call.1} parent=5 // pred_region
        // Predicated region
        $region49: #{tpu_custom_call.1} parent=47 // pred_check
          %p519 = pneg %p215
        $region50: #{tpu_custom_call.1} parent=47 // pred_check_branch
          %521 = sbr.rel (%p519) target = $region52
        $region51: #{tpu_custom_call.1} parent=47 // pred_region
          %p522 = scmp.lt.s32.totalorder %s27, 1
          %s523 = scalar_select %p522, %s27, 1
          %s524 = smul.addr %s523, 4
          %s525 = smul.addr %s524, 8
          %s526 = scalar_lea.vmem %s8, %s525
        $region52: #{tpu_custom_call.1} parent=47 // pred_fallthru
          _
        // Predicated region
        $region53: #{tpu_custom_call.1} parent=47 // pred_check
          %p527 = pneg %p241
        $region54: #{tpu_custom_call.1} parent=47 // pred_check_branch
          %529 = sbr.rel (%p527) target = $region56
        $region55: #{tpu_custom_call.1} parent=47 // pred_region
          %p530 = scmp.lt.s32.totalorder %s27, 1
          %s531 = scalar_select %p530, %s27, 1
          %s532 = scalar_lea.vmem %s9, %s531
        $region56: #{tpu_custom_call.1} parent=47 // pred_fallthru
          _
        // Predicated region
        $region57: #{tpu_custom_call.1} parent=47 // pred_check
          %p533 = pneg %p267
        $region58: #{tpu_custom_call.1} parent=47 // pred_check_branch
          %535 = sbr.rel (%p533) target = $region60
        $region59: #{tpu_custom_call.1} parent=47 // pred_region
          %p536 = scmp.lt.s32.totalorder %s27, 1
          %s537 = scalar_select %p536, %s27, 1
          %s538 = smul.addr %s537, 16
          %s539 = smul.addr %s538, 8
          %s540 = scalar_lea.vmem %s10, %s539
        $region60: #{tpu_custom_call.1} parent=47 // pred_fallthru
          _
        // Predicated region
        $region61: #{tpu_custom_call.1} parent=47 // pred_check
          %p541 = pneg %p293
        $region62: #{tpu_custom_call.1} parent=47 // pred_check_branch
          %543 = sbr.rel (%p541) target = $region64
        $region63: #{tpu_custom_call.1} parent=47 // pred_region
          %p544 = scmp.lt.s32.totalorder %s27, 1
          %s545 = scalar_select %p544, %s27, 1
          %s546 = smul.addr %s545, 16
          %s547 = smul.addr %s546, 8
          %s548 = scalar_lea.vmem %s11, %s547
        $region64: #{tpu_custom_call.1} parent=47 // pred_fallthru
          _
        // Predicated region
        $region65: #{tpu_custom_call.1} parent=47 // pred_check
          %p549 = pneg %p319
        $region66: #{tpu_custom_call.1} parent=47 // pred_check_branch
          %551 = sbr.rel (%p549) target = $region68
        $region67: #{tpu_custom_call.1} parent=47 // pred_region
          %p552 = scmp.lt.s32.totalorder %s27, 1
          %s553 = scalar_select %p552, %s27, 1
          %s554 = scalar_lea.vmem %s12, %s553
        $region68: #{tpu_custom_call.1} parent=47 // pred_fallthru
          _
        // Predicated region
        $region69: #{tpu_custom_call.1} parent=47 // pred_check
          %p555 = pneg %p345
        $region70: #{tpu_custom_call.1} parent=47 // pred_check_branch
          %557 = sbr.rel (%p555) target = $region72
        $region71: #{tpu_custom_call.1} parent=47 // pred_region
          %p558 = scmp.lt.s32.totalorder %s27, 1
          %s559 = scalar_select %p558, %s27, 1
          %s560 = smul.addr %s559, 8
          %s561 = scalar_lea.vmem %s13, %s560
        $region72: #{tpu_custom_call.1} parent=47 // pred_fallthru
          _
        // Predicated region
        $region73: #{tpu_custom_call.1} parent=47 // pred_check
          %p562 = pneg %p371
        $region74: #{tpu_custom_call.1} parent=47 // pred_check_branch
          %564 = sbr.rel (%p562) target = $region76
        $region75: #{tpu_custom_call.1} parent=47 // pred_region
          %p565 = scmp.lt.s32.totalorder %s27, 1
          %s566 = scalar_select %p565, %s27, 1
          %s567 = scalar_lea.vmem %s14, %s566
        $region76: #{tpu_custom_call.1} parent=47 // pred_fallthru
          _
        // Predicated region
        $region77: #{tpu_custom_call.1} parent=47 // pred_check
          %p568 = pneg %p397
        $region78: #{tpu_custom_call.1} parent=47 // pred_check_branch
          %570 = sbr.rel (%p568) target = $region80
        $region79: #{tpu_custom_call.1} parent=47 // pred_region
          %p571 = scmp.lt.s32.totalorder %s27, 1
          %s572 = scalar_select %p571, %s27, 1
          %s573 = scalar_lea.vmem %s15, %s572
        $region80: #{tpu_custom_call.1} parent=47 // pred_fallthru
          _
        // Predicated region
        $region81: #{tpu_custom_call.1} parent=47 // pred_check
          %p574 = pneg %p423
        $region82: #{tpu_custom_call.1} parent=47 // pred_check_branch
          %576 = sbr.rel (%p574) target = $region84
        $region83: #{tpu_custom_call.1} parent=47 // pred_region
          %p577 = scmp.lt.s32.totalorder %s27, 1
          %s578 = scalar_select %p577, %s27, 1
          %s579 = scalar_lea.vmem %s16, %s578
        $region84: #{tpu_custom_call.1} parent=47 // pred_fallthru
          _
        // Predicated region
        $region85: #{tpu_custom_call.1} parent=47 // pred_check
          %p580 = pneg %p449
        $region86: #{tpu_custom_call.1} parent=47 // pred_check_branch
          %582 = sbr.rel (%p580) target = $region88
        $region87: #{tpu_custom_call.1} parent=47 // pred_region
          %p583 = scmp.lt.s32.totalorder %s27, 1
          %s584 = scalar_select %p583, %s27, 1
          %s585 = scalar_lea.vmem %s17, %s584
        $region88: #{tpu_custom_call.1} parent=47 // pred_fallthru
          _
      $region48: #{tpu_custom_call.1} parent=5 // pred_fallthru
        _
      %p586 = scmp.le.s32.totalorder 1, %s27
      %p587 = scmp.lt.s32.totalorder %s27, 3
      %p588 = pnand %p586, %p587
      %p589 = pneg %p588
      // Predicated region
      $region89: #{tpu_custom_call.1} parent=5 // pred_check
        _
      $region90: #{tpu_custom_call.1} parent=5 // pred_check_branch
        %591 = sbr.rel (%p588) target = $region92
      $region91: #{tpu_custom_call.1} parent=5 // pred_region
        %s592 = ssub.s32 %s27, 1
        %p593 = pneg %p48
        %p594 = pneg %p45
        %p595 = pneg %p69
        %p596 = pneg %p66
        %p597 = pneg %p90
        %p598 = pneg %p87
        %p599 = pneg %p111
        %p600 = pneg %p108
        %p601 = pneg %p132
        %p602 = pneg %p129
        %p603 = pneg %p153
        %p604 = pneg %p150
        %p605 = pneg %p174
        %p606 = pneg %p171
        %p607 = pneg %p195
        %p608 = pneg %p192
        %p609 = scmp.lt.s32.totalorder %s32, 1
        %s610 = scalar_select %p609, %s32, 1
        %s611 = smul.addr %s610, 4
        %s612 = smul.addr %s611, 8
        %s613 = scalar_lea.vmem %s8, %s612
        %p614 = pneg %p221
        %p615 = pneg %p218
        %p616 = scmp.lt.s32.totalorder %s32, 1
        %s617 = scalar_select %p616, %s32, 1
        %s618 = scalar_lea.vmem %s9, %s617
        %p619 = pneg %p247
        %p620 = pneg %p244
        %p621 = scmp.lt.s32.totalorder %s32, 1
        %s622 = scalar_select %p621, %s32, 1
        %s623 = smul.addr %s622, 16
        %s624 = smul.addr %s623, 8
        %s625 = scalar_lea.vmem %s10, %s624
        %p626 = pneg %p273
        %p627 = pneg %p270
        %p628 = scmp.lt.s32.totalorder %s32, 1
        %s629 = scalar_select %p628, %s32, 1
        %s630 = smul.addr %s629, 16
        %s631 = smul.addr %s630, 8
        %s632 = scalar_lea.vmem %s11, %s631
        %p633 = pneg %p299
        %p634 = pneg %p296
        %p635 = scmp.lt.s32.totalorder %s32, 1
        %s636 = scalar_select %p635, %s32, 1
        %s637 = scalar_lea.vmem %s12, %s636
        %p638 = pneg %p325
        %p639 = pneg %p322
        %p640 = scmp.lt.s32.totalorder %s32, 1
        %s641 = scalar_select %p640, %s32, 1
        %s642 = smul.addr %s641, 8
        %s643 = scalar_lea.vmem %s13, %s642
        %p644 = pneg %p351
        %p645 = pneg %p348
        %p646 = scmp.lt.s32.totalorder %s32, 1
        %s647 = scalar_select %p646, %s32, 1
        %s648 = scalar_lea.vmem %s14, %s647
        %p649 = pneg %p377
        %p650 = pneg %p374
        %p651 = scmp.lt.s32.totalorder %s32, 1
        %s652 = scalar_select %p651, %s32, 1
        %s653 = scalar_lea.vmem %s15, %s652
        %p654 = pneg %p403
        %p655 = pneg %p400
        %p656 = scmp.lt.s32.totalorder %s32, 1
        %s657 = scalar_select %p656, %s32, 1
        %s658 = scalar_lea.vmem %s16, %s657
        %p659 = pneg %p429
        %p660 = pneg %p426
        %p661 = scmp.lt.s32.totalorder %s32, 1
        %s662 = scalar_select %p661, %s32, 1
        %s663 = scalar_lea.vmem %s17, %s662
        %p664 = pneg %p455
        %p665 = pneg %p452
        %p666 = pneg %p476
        %p667 = pneg %p473
        %p668 = scmp.lt.s32.totalorder %s32, 1
        %s669 = scalar_select %p668, %s32, 1
        %s670 = smul.addr %s669, 4
        %s671 = smul.addr %s670, 8
        %s672 = scalar_lea.vmem %s8, %s671
        %p673 = scmp.lt.s32.totalorder %s32, 1
        %s674 = scalar_select %p673, %s32, 1
        %s675 = scalar_lea.vmem %s9, %s674
        %p676 = scmp.lt.s32.totalorder %s32, 1
        %s677 = scalar_select %p676, %s32, 1
        %s678 = smul.addr %s677, 16
        %s679 = smul.addr %s678, 8
        %s680 = scalar_lea.vmem %s10, %s679
        %p681 = scmp.lt.s32.totalorder %s32, 1
        %s682 = scalar_select %p681, %s32, 1
        %s683 = smul.addr %s682, 16
        %s684 = smul.addr %s683, 8
        %s685 = scalar_lea.vmem %s11, %s684
        %p686 = scmp.lt.s32.totalorder %s32, 1
        %s687 = scalar_select %p686, %s32, 1
        %s688 = scalar_lea.vmem %s12, %s687
        %p689 = scmp.lt.s32.totalorder %s32, 1
        %s690 = scalar_select %p689, %s32, 1
        %s691 = smul.addr %s690, 8
        %s692 = scalar_lea.vmem %s13, %s691
        %p693 = scmp.lt.s32.totalorder %s32, 1
        %s694 = scalar_select %p693, %s32, 1
        %s695 = scalar_lea.vmem %s14, %s694
        %p696 = scmp.lt.s32.totalorder %s32, 1
        %s697 = scalar_select %p696, %s32, 1
        %s698 = scalar_lea.vmem %s15, %s697
        %p699 = scmp.lt.s32.totalorder %s32, 1
        %s700 = scalar_select %p699, %s32, 1
        %s701 = scalar_lea.vmem %s16, %s700
        %p702 = scmp.lt.s32.totalorder %s32, 1
        %s703 = scalar_select %p702, %s32, 1
        %s704 = scalar_lea.vmem %s17, %s703
        %v705 = vld [vmem:[#allocation2] sm:$0x1]
        %v706 = vld [vmem:[%s704] sm:$0x1]
        %p707 = scmp.eq.s32.totalorder %s32, 0
        // Predicated region
        $region93: #{tpu_custom_call.1} parent=91 // pred_check
          %p708 = pneg %p707
        $region94: #{tpu_custom_call.1} parent=91 // pred_check_branch
          %710 = sbr.rel (%p708) target = $region96
        $region95: #{tpu_custom_call.1} parent=91 // pred_region
          %v711 = vld [vmem:[%s0] sm:$0xff]
          %v712 = vld [vmem:[%s0 + $0x8] sm:$0xff]
          %v713 = vld [vmem:[%s1] sm:$0xff]
          %v714 = vld [vmem:[%s1 + $0x8] sm:$0xff]
          %v715 = vld [vmem:[%s1 + $0x10] sm:$0xff]
          %vm716 = vcmask 195584
          %v718 = vsel %vm716, %v711, 0
          %v721 = vsel %vm716, %v712, 0
          %723 = vmatprep.subr.mxu0 0.0
          %724 = vmatpush1.msra.mxu0 0.0
          %725 = vmatprep.subr.mxu0 0.0
          %726 = vmatpush1.msra.mxu0 0.0
          %727 = vmatprep.subr.mxu0 0.0
          %728 = vmatpush1.msra.mxu0 0.0
          %729 = vmatprep.subr.mxu0 0.0
          %730 = vmatpush1.msra.mxu0 0.0
          %731 = vmatprep.subr.mxu0 0.0
          %732 = vmatpush1.msra.mxu0 0.0
          %733 = vmatprep.subr.mxu0 0.0
          %734 = vmatpush1.msra.mxu0 0.0
          %735 = vmatprep.subr.mxu0 0.0
          %736 = vmatpush1.msra.mxu0 0.0
          %737 = vmatprep.subr.mxu0 0.0
          %738 = vmatpush1.msra.mxu0 0.0
          %739 = vmatprep.subr.mxu0 0.0
          %740 = vmatpush1.msra.mxu0 0.0
          %741 = vmatprep.subr.mxu0 0.0
          %742 = vmatpush1.msra.mxu0 0.0
          %743 = vmatprep.subr.mxu0 0.0
          %744 = vmatpush1.msra.mxu0 0.0
          %745 = vmatprep.subr.mxu0 0.0
          %746 = vmatpush1.msra.mxu0 0.0
          %747 = vmatprep.subr.mxu0 0.0
          %748 = vmatpush1.msra.mxu0 0.0
          %749 = vmatprep.subr.mxu0 0.0
          %750 = vmatpush1.msra.mxu0 %v715
          %751 = vmatprep.subr.mxu0 0.0
          %752 = vmatpush1.msra.mxu0 %v714
          %753 = vmatprep.subr.mxu0 0.0
          %754 = vmatpush1.msra.mxu0 %v713
          %755 = vmatprep.subr.mxu0 0.0
          %756 = vmatpush2.msra.mxu0 0.0
          %757 = vmatprep.subr.mxu0 0.0
          %758 = vmatpush2.msra.mxu0 0.0
          %759 = vmatprep.subr.mxu0 0.0
          %760 = vmatpush2.msra.mxu0 0.0
          %761 = vmatprep.subr.mxu0 0.0
          %762 = vmatpush2.msra.mxu0 0.0
          %763 = vmatprep.subr.mxu0 0.0
          %764 = vmatpush2.msra.mxu0 0.0
          %765 = vmatprep.subr.mxu0 0.0
          %766 = vmatpush2.msra.mxu0 0.0
          %767 = vmatprep.subr.mxu0 0.0
          %768 = vmatpush2.msra.mxu0 0.0
          %769 = vmatprep.subr.mxu0 0.0
          %770 = vmatpush2.msra.mxu0 0.0
          %771 = vmatprep.subr.mxu0 0.0
          %772 = vmatpush2.msra.mxu0 0.0
          %773 = vmatprep.subr.mxu0 0.0
          %774 = vmatpush2.msra.mxu0 0.0
          %775 = vmatprep.subr.mxu0 0.0
          %776 = vmatpush2.msra.mxu0 0.0
          %777 = vmatprep.subr.mxu0 0.0
          %778 = vmatpush2.msra.mxu0 0.0
          %779 = vmatprep.subr.mxu0 0.0
          %780 = vmatpush2.msra.mxu0 0.0
          %781 = vmatprep.subr.mxu0 0.0
          %782 = vmatpush2.msra.mxu0 0.0
          %783 = vmatprep.subr.mxu0 0.0
          %784 = vmatpush2.msra.mxu0 0.0
          %785 = vmatprep.subr.mxu0 0.0
          %786 = vmatpush2.msra.mxu0 0.0
          %787 = vmatprep.mubr.f32.mxu0 0.0
          %788 = vmatmul.mubr.f32.gmra.mxu0 %v718
          %v789 = vpop.f32.mrf.mxu0
          %v790 = vadd.f32 0.0, %v789
          %v791 = vpop.f32.mrf.mxu0
          %792 = vmatprep.mubr.f32.mxu0 0.0
          %793 = vmatmul.mubr.f32.gmra.mxu0 %v721
          %v794 = vpop.f32.mrf.mxu0
          %v795 = vadd.f32 0.0, %v794
          %v796 = vpop.f32.mrf.mxu0
          %797 = vdwg.mxu0
          %vm798 = vcmp.gt.f32.partialorder %v790, 0.0
          %vm799 = vcmp.gt.f32.partialorder %v795, 0.0
          %v801 = vlaneseq
          %v802 = vshrl.u32 %v801, 7
          %v803 = vsub.s32 0, %v802
          %v804 = vrot.slane %v705, %v803
          %805 = vset.pattern.permute.xlu0 0
          %806 = vperm.xlu0 %805, %v804
          %v807 = vpop.permute.xlu0 %806
          %v809 = vmul.f32 %v807, %v790
          %v810 = vmul.f32 %v807, %v795
          %v811 = vsel %vm798, %v790, %v809
          %v812 = vsel %vm799, %v795, %v810
          %vm813 = vcmask 261120
          %814 = vst.msk [vmem:[#allocation3] sm:$0xff] %vm813, %v811
          %815 = vst.msk [vmem:[#allocation3 + $0x8] sm:$0xff] %vm813, %v812
        $region96: #{tpu_custom_call.1} parent=91 // pred_fallthru
          _
        %v816 = vld [vmem:[#allocation3] sm:$0xff]
        %v817 = vld [vmem:[#allocation3 + $0x8] sm:$0xff]
        %v818 = vld [vmem:[%s2] sm:$0xff]
        %v819 = vld [vmem:[%s2 + $0x8] sm:$0xff]
        %v820 = vld [vmem:[%s2 + $0x10] sm:$0xff]
        %v821 = vld [vmem:[%s2 + $0x18] sm:$0xff]
        %v822 = vld [vmem:[%s2 + $0x20] sm:$0xff]
        %v823 = vld [vmem:[%s3] sm:$0xff]
        %v824 = vld [vmem:[%s3 + $0x8] sm:$0xff]
        %v825 = vld [vmem:[%s3 + $0x10] sm:$0xff]
        %v826 = vld [vmem:[%s3 + $0x18] sm:$0xff]
        %v827 = vld [vmem:[%s3 + $0x20] sm:$0xff]
        %v828 = vld [vmem:[%s672] sm:$0xff]
        %v829 = vld [vmem:[%s672 + $0x8] sm:$0xff]
        %v830 = vld [vmem:[%s672 + $0x10] sm:$0xff]
        %v831 = vld [vmem:[%s672 + $0x18] sm:$0xff]
        %v832 = vld [vmem:[%s675] sm:$0x1]
        %v834 = vlaneseq
        %v835 = vshrl.u32 %v834, 7
        %v836 = vsub.s32 0, %v835
        %v837 = vrot.slane %v832, %v836
        %vm839 = vcmask 261120
        %v841 = vsel %vm839, %v816, 0
        %v844 = vsel %vm839, %v817, 0
        %846 = vmatprep.subr.mxu0 0.0
        %847 = vmatpush1.msra.mxu0 0.0
        %848 = vmatprep.subr.mxu0 0.0
        %849 = vmatpush1.msra.mxu0 0.0
        %850 = vmatprep.subr.mxu0 0.0
        %851 = vmatpush1.msra.mxu0 0.0
        %852 = vmatprep.subr.mxu0 0.0
        %853 = vmatpush1.msra.mxu0 0.0
        %854 = vmatprep.subr.mxu0 0.0
        %855 = vmatpush1.msra.mxu0 0.0
        %856 = vmatprep.subr.mxu0 0.0
        %857 = vmatpush1.msra.mxu0 0.0
        %858 = vmatprep.subr.mxu0 0.0
        %859 = vmatpush1.msra.mxu0 0.0
        %860 = vmatprep.subr.mxu0 0.0
        %861 = vmatpush1.msra.mxu0 0.0
        %862 = vmatprep.subr.mxu0 0.0
        %863 = vmatpush1.msra.mxu0 0.0
        %864 = vmatprep.subr.mxu0 0.0
        %865 = vmatpush1.msra.mxu0 0.0
        %866 = vmatprep.subr.mxu0 0.0
        %867 = vmatpush1.msra.mxu0 0.0
        %868 = vmatprep.subr.mxu0 0.0
        %869 = vmatpush1.msra.mxu0 0.0
        %870 = vmatprep.subr.mxu0 0.0
        %871 = vmatpush1.msra.mxu0 %v831
        %872 = vmatprep.subr.mxu0 0.0
        %873 = vmatpush1.msra.mxu0 %v830
        %874 = vmatprep.subr.mxu0 0.0
        %875 = vmatpush1.msra.mxu0 %v829
        %876 = vmatprep.subr.mxu0 0.0
        %877 = vmatpush1.msra.mxu0 %v828
        %878 = vmatprep.subr.mxu0 0.0
        %879 = vmatpush2.msra.mxu0 0.0
        %880 = vmatprep.subr.mxu0 0.0
        %881 = vmatpush2.msra.mxu0 0.0
        %882 = vmatprep.subr.mxu0 0.0
        %883 = vmatpush2.msra.mxu0 0.0
        %884 = vmatprep.subr.mxu0 0.0
        %885 = vmatpush2.msra.mxu0 0.0
        %886 = vmatprep.subr.mxu0 0.0
        %887 = vmatpush2.msra.mxu0 0.0
        %888 = vmatprep.subr.mxu0 0.0
        %889 = vmatpush2.msra.mxu0 0.0
        %890 = vmatprep.subr.mxu0 0.0
        %891 = vmatpush2.msra.mxu0 0.0
        %892 = vmatprep.subr.mxu0 0.0
        %893 = vmatpush2.msra.mxu0 0.0
        %894 = vmatprep.subr.mxu0 0.0
        %895 = vmatpush2.msra.mxu0 0.0
        %896 = vmatprep.subr.mxu0 0.0
        %897 = vmatpush2.msra.mxu0 0.0
        %898 = vmatprep.subr.mxu0 0.0
        %899 = vmatpush2.msra.mxu0 0.0
        %900 = vmatprep.subr.mxu0 0.0
        %901 = vmatpush2.msra.mxu0 0.0
        %902 = vmatprep.subr.mxu0 0.0
        %903 = vmatpush2.msra.mxu0 0.0
        %904 = vmatprep.subr.mxu0 0.0
        %905 = vmatpush2.msra.mxu0 0.0
        %906 = vmatprep.subr.mxu0 0.0
        %907 = vmatpush2.msra.mxu0 0.0
        %908 = vmatprep.subr.mxu0 0.0
        %909 = vmatpush2.msra.mxu0 0.0
        %910 = vmatprep.mubr.f32.mxu0 0.0
        %911 = vmatmul.mubr.f32.gmra.mxu0 %v841
        %v912 = vpop.f32.mrf.mxu0
        %v913 = vadd.f32 %v837, %v912
        %v914 = vpop.f32.mrf.mxu0
        %915 = vmatprep.mubr.f32.mxu0 0.0
        %916 = vmatmul.mubr.f32.gmra.mxu0 %v844
        %v917 = vpop.f32.mrf.mxu0
        %v918 = vadd.f32 %v837, %v917
        %v919 = vpop.f32.mrf.mxu0
        %920 = vdwg.mxu0
        %vm921 = vcmp.gt.f32.partialorder %v913, 0.0
        %vm922 = vcmp.gt.f32.partialorder %v918, 0.0
        %v924 = vlaneseq
        %v925 = vshrl.u32 %v924, 7
        %v926 = vsub.s32 0, %v925
        %v927 = vrot.slane %v706, %v926
        %928 = vset.pattern.permute.xlu0 0
        %929 = vperm.xlu0 %928, %v927
        %v930 = vpop.permute.xlu0 %929
        %v932 = vmul.f32 %v930, %v913
        %v933 = vmul.f32 %v930, %v918
        %v934 = vsel %vm921, %v913, %v932
        %v935 = vsel %vm922, %v918, %v933
        %v936 = vld [vmem:[%s4] sm:$0xff]
        %v937 = vld [vmem:[%s4 + $0x8] sm:$0xff]
        %v938 = vld [vmem:[%s4 + $0x10] sm:$0xff]
        %v939 = vld [vmem:[%s4 + $0x18] sm:$0xff]
        %v940 = vld [vmem:[%s4 + $0x20] sm:$0xff]
        %v941 = vld [vmem:[%s692] sm:$0xff]
        %v942 = vld [vmem:[%s695] sm:$0x1]
        %v944 = vlaneseq
        %v945 = vshrl.u32 %v944, 7
        %v946 = vsub.s32 0, %v945
        %v947 = vrot.slane %v942, %v946
        %vm949 = vcmask 64512
        %v951 = vsel %vm949, %v936, 0
        %v954 = vsel %vm949, %v937, 0
        %v957 = vsel %vm949, %v938, 0
        %v960 = vsel %vm949, %v939, 0
        %v963 = vsel %vm949, %v940, 0
        %965 = vmatprep.subr.mxu0 0.0
        %966 = vmatpush1.msra.mxu0 0.0
        %967 = vmatprep.subr.mxu0 0.0
        %968 = vmatpush1.msra.mxu0 0.0
        %969 = vmatprep.subr.mxu0 0.0
        %970 = vmatpush1.msra.mxu0 0.0
        %971 = vmatprep.subr.mxu0 0.0
        %972 = vmatpush1.msra.mxu0 0.0
        %973 = vmatprep.subr.mxu0 0.0
        %974 = vmatpush1.msra.mxu0 0.0
        %975 = vmatprep.subr.mxu0 0.0
        %976 = vmatpush1.msra.mxu0 0.0
        %977 = vmatprep.subr.mxu0 0.0
        %978 = vmatpush1.msra.mxu0 0.0
        %979 = vmatprep.subr.mxu0 0.0
        %980 = vmatpush1.msra.mxu0 0.0
        %981 = vmatprep.subr.mxu0 0.0
        %982 = vmatpush1.msra.mxu0 0.0
        %983 = vmatprep.subr.mxu0 0.0
        %984 = vmatpush1.msra.mxu0 0.0
        %985 = vmatprep.subr.mxu0 0.0
        %986 = vmatpush1.msra.mxu0 0.0
        %987 = vmatprep.subr.mxu0 0.0
        %988 = vmatpush1.msra.mxu0 0.0
        %989 = vmatprep.subr.mxu0 0.0
        %990 = vmatpush1.msra.mxu0 0.0
        %991 = vmatprep.subr.mxu0 0.0
        %992 = vmatpush1.msra.mxu0 0.0
        %993 = vmatprep.subr.mxu0 0.0
        %994 = vmatpush1.msra.mxu0 0.0
        %995 = vmatprep.subr.mxu0 0.0
        %996 = vmatpush1.msra.mxu0 %v941
        %997 = vmatprep.subr.mxu0 0.0
        %998 = vmatpush2.msra.mxu0 0.0
        %999 = vmatprep.subr.mxu0 0.0
        %1000 = vmatpush2.msra.mxu0 0.0
        %1001 = vmatprep.subr.mxu0 0.0
        %1002 = vmatpush2.msra.mxu0 0.0
        %1003 = vmatprep.subr.mxu0 0.0
        %1004 = vmatpush2.msra.mxu0 0.0
        %1005 = vmatprep.subr.mxu0 0.0
        %1006 = vmatpush2.msra.mxu0 0.0
        %1007 = vmatprep.subr.mxu0 0.0
        %1008 = vmatpush2.msra.mxu0 0.0
        %1009 = vmatprep.subr.mxu0 0.0
        %1010 = vmatpush2.msra.mxu0 0.0
        %1011 = vmatprep.subr.mxu0 0.0
        %1012 = vmatpush2.msra.mxu0 0.0
        %1013 = vmatprep.subr.mxu0 0.0
        %1014 = vmatpush2.msra.mxu0 0.0
        %1015 = vmatprep.subr.mxu0 0.0
        %1016 = vmatpush2.msra.mxu0 0.0
        %1017 = vmatprep.subr.mxu0 0.0
        %1018 = vmatpush2.msra.mxu0 0.0
        %1019 = vmatprep.subr.mxu0 0.0
        %1020 = vmatpush2.msra.mxu0 0.0
        %1021 = vmatprep.subr.mxu0 0.0
        %1022 = vmatpush2.msra.mxu0 0.0
        %1023 = vmatprep.subr.mxu0 0.0
        %1024 = vmatpush2.msra.mxu0 0.0
        %1025 = vmatprep.subr.mxu0 0.0
        %1026 = vmatpush2.msra.mxu0 0.0
        %1027 = vmatprep.subr.mxu0 0.0
        %1028 = vmatpush2.msra.mxu0 0.0
        %1029 = vmatprep.mubr.f32.mxu0 0.0
        %1030 = vmatmul.mubr.f32.gmra.mxu0 %v951
        %v1031 = vpop.f32.mrf.mxu0
        %v1032 = vadd.f32 %v947, %v1031
        %v1033 = vpop.f32.mrf.mxu0
        %1034 = vmatprep.mubr.f32.mxu0 0.0
        %1035 = vmatmul.mubr.f32.gmra.mxu0 %v954
        %v1036 = vpop.f32.mrf.mxu0
        %v1037 = vadd.f32 %v947, %v1036
        %v1038 = vpop.f32.mrf.mxu0
        %1039 = vmatprep.mubr.f32.mxu0 0.0
        %1040 = vmatmul.mubr.f32.gmra.mxu0 %v957
        %v1041 = vpop.f32.mrf.mxu0
        %v1042 = vadd.f32 %v947, %v1041
        %v1043 = vpop.f32.mrf.mxu0
        %1044 = vmatprep.mubr.f32.mxu0 0.0
        %1045 = vmatmul.mubr.f32.gmra.mxu0 %v960
        %v1046 = vpop.f32.mrf.mxu0
        %v1047 = vadd.f32 %v947, %v1046
        %v1048 = vpop.f32.mrf.mxu0
        %1049 = vmatprep.mubr.f32.mxu0 0.0
        %1050 = vmatmul.mubr.f32.gmra.mxu0 %v963
        %v1051 = vpop.f32.mrf.mxu0
        %v1052 = vadd.f32 %v947, %v1051
        %v1053 = vpop.f32.mrf.mxu0
        %1054 = vdwg.mxu0
        %vm1055 = vcmp.gt.f32.partialorder %v1032, 0.0
        %vm1056 = vcmp.gt.f32.partialorder %v1037, 0.0
        %vm1057 = vcmp.gt.f32.partialorder %v1042, 0.0
        %vm1058 = vcmp.gt.f32.partialorder %v1047, 0.0
        %vm1059 = vcmp.gt.f32.partialorder %v1052, 0.0
        %v1060 = vmul.f32 %v930, %v1032
        %v1061 = vmul.f32 %v930, %v1037
        %v1062 = vmul.f32 %v930, %v1042
        %v1063 = vmul.f32 %v930, %v1047
        %v1064 = vmul.f32 %v930, %v1052
        %v1065 = vsel %vm1055, %v1032, %v1060
        %v1066 = vsel %vm1056, %v1037, %v1061
        %v1067 = vsel %vm1057, %v1042, %v1062
        %v1068 = vsel %vm1058, %v1047, %v1063
        %v1069 = vsel %vm1059, %v1052, %v1064
        %vm1070 = vcmask 130048
        %v1072 = vsel %vm1070, %v818, 0
        %v1075 = vsel %vm1070, %v819, 0
        %v1078 = vsel %vm1070, %v820, 0
        %v1081 = vsel %vm1070, %v821, 0
        %v1084 = vsel %vm1070, %v822, 0
        %1086 = vmatprep.subr.mxu0 0.0
        %1087 = vmatpush1.msra.mxu0 0.0
        %1088 = vmatprep.subr.mxu0 0.0
        %1089 = vmatpush1.msra.mxu0 0.0
        %1090 = vmatprep.subr.mxu0 0.0
        %1091 = vmatpush1.msra.mxu0 0.0
        %1092 = vmatprep.subr.mxu0 0.0
        %1093 = vmatpush1.msra.mxu0 0.0
        %1094 = vmatprep.subr.mxu0 0.0
        %1095 = vmatpush1.msra.mxu0 0.0
        %1096 = vmatprep.subr.mxu0 0.0
        %1097 = vmatpush1.msra.mxu0 0.0
        %1098 = vmatprep.subr.mxu0 0.0
        %1099 = vmatpush1.msra.mxu0 0.0
        %1100 = vmatprep.subr.mxu0 0.0
        %1101 = vmatpush1.msra.mxu0 0.0
        %1102 = vmatprep.subr.mxu0 0.0
        %1103 = vmatpush1.msra.mxu0 0.0
        %1104 = vmatprep.subr.mxu0 0.0
        %1105 = vmatpush1.msra.mxu0 0.0
        %1106 = vmatprep.subr.mxu0 0.0
        %1107 = vmatpush1.msra.mxu0 0.0
        %1108 = vmatprep.subr.mxu0 0.0
        %1109 = vmatpush1.msra.mxu0 0.0
        %1110 = vmatprep.subr.mxu0 0.0
        %1111 = vmatpush1.msra.mxu0 0.0
        %1112 = vmatprep.subr.mxu0 0.0
        %1113 = vmatpush1.msra.mxu0 0.0
        %1114 = vmatprep.subr.mxu0 0.0
        %1115 = vmatpush1.msra.mxu0 %v935
        %1116 = vmatprep.subr.mxu0 0.0
        %1117 = vmatpush1.msra.mxu0 %v934
        %1118 = vmatprep.subr.mxu0 0.0
        %1119 = vmatpush2.msra.mxu0 0.0
        %1120 = vmatprep.subr.mxu0 0.0
        %1121 = vmatpush2.msra.mxu0 0.0
        %1122 = vmatprep.subr.mxu0 0.0
        %1123 = vmatpush2.msra.mxu0 0.0
        %1124 = vmatprep.subr.mxu0 0.0
        %1125 = vmatpush2.msra.mxu0 0.0
        %1126 = vmatprep.subr.mxu0 0.0
        %1127 = vmatpush2.msra.mxu0 0.0
        %1128 = vmatprep.subr.mxu0 0.0
        %1129 = vmatpush2.msra.mxu0 0.0
        %1130 = vmatprep.subr.mxu0 0.0
        %1131 = vmatpush2.msra.mxu0 0.0
        %1132 = vmatprep.subr.mxu0 0.0
        %1133 = vmatpush2.msra.mxu0 0.0
        %1134 = vmatprep.subr.mxu0 0.0
        %1135 = vmatpush2.msra.mxu0 0.0
        %1136 = vmatprep.subr.mxu0 0.0
        %1137 = vmatpush2.msra.mxu0 0.0
        %1138 = vmatprep.subr.mxu0 0.0
        %1139 = vmatpush2.msra.mxu0 0.0
        %1140 = vmatprep.subr.mxu0 0.0
        %1141 = vmatpush2.msra.mxu0 0.0
        %1142 = vmatprep.subr.mxu0 0.0
        %1143 = vmatpush2.msra.mxu0 0.0
        %1144 = vmatprep.subr.mxu0 0.0
        %1145 = vmatpush2.msra.mxu0 0.0
        %1146 = vmatprep.subr.mxu0 0.0
        %1147 = vmatpush2.msra.mxu0 0.0
        %1148 = vmatprep.subr.mxu0 0.0
        %1149 = vmatpush2.msra.mxu0 0.0
        %1150 = vmatprep.mubr.f32.mxu0 0.0
        %1151 = vmatmul.mubr.f32.gmra.mxu0 %v1072
        %v1152 = vpop.f32.mrf.mxu0
        %v1153 = vadd.f32 %v1065, %v1152
        %v1154 = vpop.f32.mrf.mxu0
        %1155 = vmatprep.mubr.f32.mxu0 0.0
        %1156 = vmatmul.mubr.f32.gmra.mxu0 %v1075
        %v1157 = vpop.f32.mrf.mxu0
        %v1158 = vadd.f32 %v1066, %v1157
        %v1159 = vpop.f32.mrf.mxu0
        %1160 = vmatprep.mubr.f32.mxu0 0.0
        %1161 = vmatmul.mubr.f32.gmra.mxu0 %v1078
        %v1162 = vpop.f32.mrf.mxu0
        %v1163 = vadd.f32 %v1067, %v1162
        %v1164 = vpop.f32.mrf.mxu0
        %1165 = vmatprep.mubr.f32.mxu0 0.0
        %1166 = vmatmul.mubr.f32.gmra.mxu0 %v1081
        %v1167 = vpop.f32.mrf.mxu0
        %v1168 = vadd.f32 %v1068, %v1167
        %v1169 = vpop.f32.mrf.mxu0
        %1170 = vmatprep.mubr.f32.mxu0 0.0
        %1171 = vmatmul.mubr.f32.gmra.mxu0 %v1084
        %v1172 = vpop.f32.mrf.mxu0
        %v1173 = vadd.f32 %v1069, %v1172
        %v1174 = vpop.f32.mrf.mxu0
        %1175 = vdwg.mxu0
        %v1177 = vsel %vm1070, %v823, 0
        %v1180 = vsel %vm1070, %v824, 0
        %v1183 = vsel %vm1070, %v825, 0
        %v1186 = vsel %vm1070, %v826, 0
        %v1189 = vsel %vm1070, %v827, 0
        %1191 = vmatprep.subr.mxu0 0.0
        %1192 = vmatpush1.msra.mxu0 0.0
        %1193 = vmatprep.subr.mxu0 0.0
        %1194 = vmatpush1.msra.mxu0 0.0
        %1195 = vmatprep.subr.mxu0 0.0
        %1196 = vmatpush1.msra.mxu0 0.0
        %1197 = vmatprep.subr.mxu0 0.0
        %1198 = vmatpush1.msra.mxu0 0.0
        %1199 = vmatprep.subr.mxu0 0.0
        %1200 = vmatpush1.msra.mxu0 0.0
        %1201 = vmatprep.subr.mxu0 0.0
        %1202 = vmatpush1.msra.mxu0 0.0
        %1203 = vmatprep.subr.mxu0 0.0
        %1204 = vmatpush1.msra.mxu0 0.0
        %1205 = vmatprep.subr.mxu0 0.0
        %1206 = vmatpush1.msra.mxu0 0.0
        %1207 = vmatprep.subr.mxu0 0.0
        %1208 = vmatpush1.msra.mxu0 0.0
        %1209 = vmatprep.subr.mxu0 0.0
        %1210 = vmatpush1.msra.mxu0 0.0
        %1211 = vmatprep.subr.mxu0 0.0
        %1212 = vmatpush1.msra.mxu0 0.0
        %1213 = vmatprep.subr.mxu0 0.0
        %1214 = vmatpush1.msra.mxu0 0.0
        %1215 = vmatprep.subr.mxu0 0.0
        %1216 = vmatpush1.msra.mxu0 0.0
        %1217 = vmatprep.subr.mxu0 0.0
        %1218 = vmatpush1.msra.mxu0 0.0
        %1219 = vmatprep.subr.mxu0 0.0
        %1220 = vmatpush1.msra.mxu0 %v935
        %1221 = vmatprep.subr.mxu0 0.0
        %1222 = vmatpush1.msra.mxu0 %v934
        %1223 = vmatprep.subr.mxu0 0.0
        %1224 = vmatpush2.msra.mxu0 0.0
        %1225 = vmatprep.subr.mxu0 0.0
        %1226 = vmatpush2.msra.mxu0 0.0
        %1227 = vmatprep.subr.mxu0 0.0
        %1228 = vmatpush2.msra.mxu0 0.0
        %1229 = vmatprep.subr.mxu0 0.0
        %1230 = vmatpush2.msra.mxu0 0.0
        %1231 = vmatprep.subr.mxu0 0.0
        %1232 = vmatpush2.msra.mxu0 0.0
        %1233 = vmatprep.subr.mxu0 0.0
        %1234 = vmatpush2.msra.mxu0 0.0
        %1235 = vmatprep.subr.mxu0 0.0
        %1236 = vmatpush2.msra.mxu0 0.0
        %1237 = vmatprep.subr.mxu0 0.0
        %1238 = vmatpush2.msra.mxu0 0.0
        %1239 = vmatprep.subr.mxu0 0.0
        %1240 = vmatpush2.msra.mxu0 0.0
        %1241 = vmatprep.subr.mxu0 0.0
        %1242 = vmatpush2.msra.mxu0 0.0
        %1243 = vmatprep.subr.mxu0 0.0
        %1244 = vmatpush2.msra.mxu0 0.0
        %1245 = vmatprep.subr.mxu0 0.0
        %1246 = vmatpush2.msra.mxu0 0.0
        %1247 = vmatprep.subr.mxu0 0.0
        %1248 = vmatpush2.msra.mxu0 0.0
        %1249 = vmatprep.subr.mxu0 0.0
        %1250 = vmatpush2.msra.mxu0 0.0
        %1251 = vmatprep.subr.mxu0 0.0
        %1252 = vmatpush2.msra.mxu0 0.0
        %1253 = vmatprep.subr.mxu0 0.0
        %1254 = vmatpush2.msra.mxu0 0.0
        %1255 = vmatprep.mubr.f32.mxu0 0.0
        %1256 = vmatmul.mubr.f32.gmra.mxu0 %v1177
        %v1257 = vpop.f32.mrf.mxu0
        %v1258 = vadd.f32 0.0, %v1257
        %v1259 = vpop.f32.mrf.mxu0
        %1260 = vmatprep.mubr.f32.mxu0 0.0
        %1261 = vmatmul.mubr.f32.gmra.mxu0 %v1180
        %v1262 = vpop.f32.mrf.mxu0
        %v1263 = vadd.f32 0.0, %v1262
        %v1264 = vpop.f32.mrf.mxu0
        %1265 = vmatprep.mubr.f32.mxu0 0.0
        %1266 = vmatmul.mubr.f32.gmra.mxu0 %v1183
        %v1267 = vpop.f32.mrf.mxu0
        %v1268 = vadd.f32 0.0, %v1267
        %v1269 = vpop.f32.mrf.mxu0
        %1270 = vmatprep.mubr.f32.mxu0 0.0
        %1271 = vmatmul.mubr.f32.gmra.mxu0 %v1186
        %v1272 = vpop.f32.mrf.mxu0
        %v1273 = vadd.f32 0.0, %v1272
        %v1274 = vpop.f32.mrf.mxu0
        %1275 = vmatprep.mubr.f32.mxu0 0.0
        %1276 = vmatmul.mubr.f32.gmra.mxu0 %v1189
        %v1277 = vpop.f32.mrf.mxu0
        %v1278 = vadd.f32 0.0, %v1277
        %v1279 = vpop.f32.mrf.mxu0
        %1280 = vdwg.mxu0
        %v1281 = vld [vmem:[%s680] sm:$0xff]
        %v1282 = vld [vmem:[%s680 + $0x8] sm:$0xff]
        %v1283 = vld [vmem:[%s680 + $0x10] sm:$0xff]
        %v1284 = vld [vmem:[%s680 + $0x18] sm:$0xff]
        %v1285 = vld [vmem:[%s680 + $0x20] sm:$0xff]
        %v1286 = vld [vmem:[%s680 + $0x28] sm:$0xff]
        %v1287 = vld [vmem:[%s680 + $0x30] sm:$0xff]
        %v1288 = vld [vmem:[%s680 + $0x38] sm:$0xff]
        %v1289 = vld [vmem:[%s680 + $0x40] sm:$0xff]
        %v1290 = vld [vmem:[%s680 + $0x48] sm:$0xff]
        %v1291 = vld [vmem:[%s680 + $0x50] sm:$0xff]
        %v1292 = vld [vmem:[%s680 + $0x58] sm:$0xff]
        %v1293 = vld [vmem:[%s680 + $0x60] sm:$0xff]
        %v1294 = vld [vmem:[%s680 + $0x68] sm:$0xff]
        %v1295 = vld [vmem:[%s680 + $0x70] sm:$0xff]
        %v1296 = vld [vmem:[%s680 + $0x78] sm:$0xff]
        %v1297 = vld [vmem:[%s685] sm:$0xff]
        %v1298 = vld [vmem:[%s685 + $0x8] sm:$0xff]
        %v1299 = vld [vmem:[%s685 + $0x10] sm:$0xff]
        %v1300 = vld [vmem:[%s685 + $0x18] sm:$0xff]
        %v1301 = vld [vmem:[%s685 + $0x20] sm:$0xff]
        %v1302 = vld [vmem:[%s685 + $0x28] sm:$0xff]
        %v1303 = vld [vmem:[%s685 + $0x30] sm:$0xff]
        %v1304 = vld [vmem:[%s685 + $0x38] sm:$0xff]
        %v1305 = vld [vmem:[%s685 + $0x40] sm:$0xff]
        %v1306 = vld [vmem:[%s685 + $0x48] sm:$0xff]
        %v1307 = vld [vmem:[%s685 + $0x50] sm:$0xff]
        %v1308 = vld [vmem:[%s685 + $0x58] sm:$0xff]
        %v1309 = vld [vmem:[%s685 + $0x60] sm:$0xff]
        %v1310 = vld [vmem:[%s685 + $0x68] sm:$0xff]
        %v1311 = vld [vmem:[%s685 + $0x70] sm:$0xff]
        %v1312 = vld [vmem:[%s685 + $0x78] sm:$0xff]
        %1313 = vmatprep.subr.mxu0 0.0
        %1314 = vmatpush1.msra.mxu0 %v1312
        %1315 = vmatprep.subr.mxu0 0.0
        %1316 = vmatpush1.msra.mxu0 %v1311
        %1317 = vmatprep.subr.mxu0 0.0
        %1318 = vmatpush1.msra.mxu0 %v1310
        %1319 = vmatprep.subr.mxu0 0.0
        %1320 = vmatpush1.msra.mxu0 %v1309
        %1321 = vmatprep.subr.mxu0 0.0
        %1322 = vmatpush1.msra.mxu0 %v1308
        %1323 = vmatprep.subr.mxu0 0.0
        %1324 = vmatpush1.msra.mxu0 %v1307
        %1325 = vmatprep.subr.mxu0 0.0
        %1326 = vmatpush1.msra.mxu0 %v1306
        %1327 = vmatprep.subr.mxu0 0.0
        %1328 = vmatpush1.msra.mxu0 %v1305
        %1329 = vmatprep.subr.mxu0 0.0
        %1330 = vmatpush1.msra.mxu0 %v1304
        %1331 = vmatprep.subr.mxu0 0.0
        %1332 = vmatpush1.msra.mxu0 %v1303
        %1333 = vmatprep.subr.mxu0 0.0
        %1334 = vmatpush1.msra.mxu0 %v1302
        %1335 = vmatprep.subr.mxu0 0.0
        %1336 = vmatpush1.msra.mxu0 %v1301
        %1337 = vmatprep.subr.mxu0 0.0
        %1338 = vmatpush1.msra.mxu0 %v1300
        %1339 = vmatprep.subr.mxu0 0.0
        %1340 = vmatpush1.msra.mxu0 %v1299
        %1341 = vmatprep.subr.mxu0 0.0
        %1342 = vmatpush1.msra.mxu0 %v1298
        %1343 = vmatprep.subr.mxu0 0.0
        %1344 = vmatpush1.msra.mxu0 %v1297
        %1345 = vmatprep.subr.mxu0 0.0
        %1346 = vmatpush2.msra.mxu0 0.0
        %1347 = vmatprep.subr.mxu0 0.0
        %1348 = vmatpush2.msra.mxu0 0.0
        %1349 = vmatprep.subr.mxu0 0.0
        %1350 = vmatpush2.msra.mxu0 0.0
        %1351 = vmatprep.subr.mxu0 0.0
        %1352 = vmatpush2.msra.mxu0 0.0
        %1353 = vmatprep.subr.mxu0 0.0
        %1354 = vmatpush2.msra.mxu0 0.0
        %1355 = vmatprep.subr.mxu0 0.0
        %1356 = vmatpush2.msra.mxu0 0.0
        %1357 = vmatprep.subr.mxu0 0.0
        %1358 = vmatpush2.msra.mxu0 0.0
        %1359 = vmatprep.subr.mxu0 0.0
        %1360 = vmatpush2.msra.mxu0 0.0
        %1361 = vmatprep.subr.mxu0 0.0
        %1362 = vmatpush2.msra.mxu0 0.0
        %1363 = vmatprep.subr.mxu0 0.0
        %1364 = vmatpush2.msra.mxu0 0.0
        %1365 = vmatprep.subr.mxu0 0.0
        %1366 = vmatpush2.msra.mxu0 0.0
        %1367 = vmatprep.subr.mxu0 0.0
        %1368 = vmatpush2.msra.mxu0 0.0
        %1369 = vmatprep.subr.mxu0 0.0
        %1370 = vmatpush2.msra.mxu0 0.0
        %1371 = vmatprep.subr.mxu0 0.0
        %1372 = vmatpush2.msra.mxu0 0.0
        %1373 = vmatprep.subr.mxu0 0.0
        %1374 = vmatpush2.msra.mxu0 0.0
        %1375 = vmatprep.subr.mxu0 0.0
        %1376 = vmatpush2.msra.mxu0 0.0
        %1377 = vmatprep.mubr.f32.mxu0 0.0
        %1378 = vmatmul.mubr.f32.gmra.mxu0 %v1153
        %v1379 = vpop.f32.mrf.mxu0
        %v1380 = vadd.f32 0.0, %v1379
        %v1381 = vpop.f32.mrf.mxu0
        %1382 = vmatprep.mubr.f32.mxu0 0.0
        %1383 = vmatmul.mubr.f32.gmra.mxu0 %v1158
        %v1384 = vpop.f32.mrf.mxu0
        %v1385 = vadd.f32 0.0, %v1384
        %v1386 = vpop.f32.mrf.mxu0
        %1387 = vmatprep.mubr.f32.mxu0 0.0
        %1388 = vmatmul.mubr.f32.gmra.mxu0 %v1163
        %v1389 = vpop.f32.mrf.mxu0
        %v1390 = vadd.f32 0.0, %v1389
        %v1391 = vpop.f32.mrf.mxu0
        %1392 = vmatprep.mubr.f32.mxu0 0.0
        %1393 = vmatmul.mubr.f32.gmra.mxu0 %v1168
        %v1394 = vpop.f32.mrf.mxu0
        %v1395 = vadd.f32 0.0, %v1394
        %v1396 = vpop.f32.mrf.mxu0
        %1397 = vmatprep.mubr.f32.mxu0 0.0
        %1398 = vmatmul.mubr.f32.gmra.mxu0 %v1173
        %v1399 = vpop.f32.mrf.mxu0
        %v1400 = vadd.f32 0.0, %v1399
        %v1401 = vpop.f32.mrf.mxu0
        %1402 = vdwg.mxu0
        %1403 = vmatprep.subr.mxu0 0.0
        %1404 = vmatpush1.msra.mxu0 %v1296
        %1405 = vmatprep.subr.mxu0 0.0
        %1406 = vmatpush1.msra.mxu0 %v1295
        %1407 = vmatprep.subr.mxu0 0.0
        %1408 = vmatpush1.msra.mxu0 %v1294
        %1409 = vmatprep.subr.mxu0 0.0
        %1410 = vmatpush1.msra.mxu0 %v1293
        %1411 = vmatprep.subr.mxu0 0.0
        %1412 = vmatpush1.msra.mxu0 %v1292
        %1413 = vmatprep.subr.mxu0 0.0
        %1414 = vmatpush1.msra.mxu0 %v1291
        %1415 = vmatprep.subr.mxu0 0.0
        %1416 = vmatpush1.msra.mxu0 %v1290
        %1417 = vmatprep.subr.mxu0 0.0
        %1418 = vmatpush1.msra.mxu0 %v1289
        %1419 = vmatprep.subr.mxu0 0.0
        %1420 = vmatpush1.msra.mxu0 %v1288
        %1421 = vmatprep.subr.mxu0 0.0
        %1422 = vmatpush1.msra.mxu0 %v1287
        %1423 = vmatprep.subr.mxu0 0.0
        %1424 = vmatpush1.msra.mxu0 %v1286
        %1425 = vmatprep.subr.mxu0 0.0
        %1426 = vmatpush1.msra.mxu0 %v1285
        %1427 = vmatprep.subr.mxu0 0.0
        %1428 = vmatpush1.msra.mxu0 %v1284
        %1429 = vmatprep.subr.mxu0 0.0
        %1430 = vmatpush1.msra.mxu0 %v1283
        %1431 = vmatprep.subr.mxu0 0.0
        %1432 = vmatpush1.msra.mxu0 %v1282
        %1433 = vmatprep.subr.mxu0 0.0
        %1434 = vmatpush1.msra.mxu0 %v1281
        %1435 = vmatprep.subr.mxu0 0.0
        %1436 = vmatpush2.msra.mxu0 0.0
        %1437 = vmatprep.subr.mxu0 0.0
        %1438 = vmatpush2.msra.mxu0 0.0
        %1439 = vmatprep.subr.mxu0 0.0
        %1440 = vmatpush2.msra.mxu0 0.0
        %1441 = vmatprep.subr.mxu0 0.0
        %1442 = vmatpush2.msra.mxu0 0.0
        %1443 = vmatprep.subr.mxu0 0.0
        %1444 = vmatpush2.msra.mxu0 0.0
        %1445 = vmatprep.subr.mxu0 0.0
        %1446 = vmatpush2.msra.mxu0 0.0
        %1447 = vmatprep.subr.mxu0 0.0
        %1448 = vmatpush2.msra.mxu0 0.0
        %1449 = vmatprep.subr.mxu0 0.0
        %1450 = vmatpush2.msra.mxu0 0.0
        %1451 = vmatprep.subr.mxu0 0.0
        %1452 = vmatpush2.msra.mxu0 0.0
        %1453 = vmatprep.subr.mxu0 0.0
        %1454 = vmatpush2.msra.mxu0 0.0
        %1455 = vmatprep.subr.mxu0 0.0
        %1456 = vmatpush2.msra.mxu0 0.0
        %1457 = vmatprep.subr.mxu0 0.0
        %1458 = vmatpush2.msra.mxu0 0.0
        %1459 = vmatprep.subr.mxu0 0.0
        %1460 = vmatpush2.msra.mxu0 0.0
        %1461 = vmatprep.subr.mxu0 0.0
        %1462 = vmatpush2.msra.mxu0 0.0
        %1463 = vmatprep.subr.mxu0 0.0
        %1464 = vmatpush2.msra.mxu0 0.0
        %1465 = vmatprep.subr.mxu0 0.0
        %1466 = vmatpush2.msra.mxu0 0.0
        %1467 = vmatprep.mubr.f32.mxu0 0.0
        %1468 = vmatmul.mubr.f32.gmra.mxu0 %v1258
        %v1469 = vpop.f32.mrf.mxu0
        %v1470 = vadd.f32 %v1380, %v1469
        %v1471 = vpop.f32.mrf.mxu0
        %1472 = vmatprep.mubr.f32.mxu0 0.0
        %1473 = vmatmul.mubr.f32.gmra.mxu0 %v1263
        %v1474 = vpop.f32.mrf.mxu0
        %v1475 = vadd.f32 %v1385, %v1474
        %v1476 = vpop.f32.mrf.mxu0
        %1477 = vmatprep.mubr.f32.mxu0 0.0
        %1478 = vmatmul.mubr.f32.gmra.mxu0 %v1268
        %v1479 = vpop.f32.mrf.mxu0
        %v1480 = vadd.f32 %v1390, %v1479
        %v1481 = vpop.f32.mrf.mxu0
        %1482 = vmatprep.mubr.f32.mxu0 0.0
        %1483 = vmatmul.mubr.f32.gmra.mxu0 %v1273
        %v1484 = vpop.f32.mrf.mxu0
        %v1485 = vadd.f32 %v1395, %v1484
        %v1486 = vpop.f32.mrf.mxu0
        %1487 = vmatprep.mubr.f32.mxu0 0.0
        %1488 = vmatmul.mubr.f32.gmra.mxu0 %v1278
        %v1489 = vpop.f32.mrf.mxu0
        %v1490 = vadd.f32 %v1400, %v1489
        %v1491 = vpop.f32.mrf.mxu0
        %1492 = vdwg.mxu0
        %vm1493 = vcmp.gt.f32.partialorder %v1470, 0.0
        %vm1494 = vcmp.gt.f32.partialorder %v1475, 0.0
        %vm1495 = vcmp.gt.f32.partialorder %v1480, 0.0
        %vm1496 = vcmp.gt.f32.partialorder %v1485, 0.0
        %vm1497 = vcmp.gt.f32.partialorder %v1490, 0.0
        %v1498 = vmul.f32 %v930, %v1470
        %v1499 = vmul.f32 %v930, %v1475
        %v1500 = vmul.f32 %v930, %v1480
        %v1501 = vmul.f32 %v930, %v1485
        %v1502 = vmul.f32 %v930, %v1490
        %v1503 = vsel %vm1493, %v1470, %v1498
        %v1504 = vsel %vm1494, %v1475, %v1499
        %v1505 = vsel %vm1495, %v1480, %v1500
        %v1506 = vsel %vm1496, %v1485, %v1501
        %v1507 = vsel %vm1497, %v1490, %v1502
        %v1508 = vsub.f32 %v818, 1.0
        %v1509 = vsub.f32 %v819, 1.0
        %v1510 = vsub.f32 %v820, 1.0
        %v1511 = vsub.f32 %v821, 1.0
        %v1512 = vsub.f32 %v822, 1.0
        %v1513 = vmul.f32 %v1508, 1e+30
        %v1514 = vmul.f32 %v1509, 1e+30
        %v1515 = vmul.f32 %v1510, 1e+30
        %v1516 = vmul.f32 %v1511, 1e+30
        %v1517 = vmul.f32 %v1512, 1e+30
        %1519 = vset.pattern.permute.xlu0 0
        %1520 = vperm.xlu0 %1519, %v1503
        %v1521 = vpop.permute.xlu0 %1520
        %1524 = vset.pattern.permute.xlu0 0
        %1525 = vperm.xlu0 %1524, %v1504
        %v1526 = vpop.permute.xlu0 %1525
        %1529 = vset.pattern.permute.xlu0 0
        %1530 = vperm.xlu0 %1529, %v1505
        %v1531 = vpop.permute.xlu0 %1530
        %1534 = vset.pattern.permute.xlu0 0
        %1535 = vperm.xlu0 %1534, %v1506
        %v1536 = vpop.permute.xlu0 %1535
        %1539 = vset.pattern.permute.xlu0 0
        %1540 = vperm.xlu0 %1539, %v1507
        %v1541 = vpop.permute.xlu0 %1540
        %v1543 = vmul.f32 %v1521, %v818
        %v1544 = vmul.f32 %v1526, %v819
        %v1545 = vmul.f32 %v1531, %v820
        %v1546 = vmul.f32 %v1536, %v821
        %v1547 = vmul.f32 %v1541, %v822
        %v1548 = vadd.f32 %v1543, %v1513
        %v1549 = vadd.f32 %v1544, %v1514
        %v1550 = vadd.f32 %v1545, %v1515
        %v1551 = vadd.f32 %v1546, %v1516
        %v1552 = vadd.f32 %v1547, %v1517
        %v1553 = vsel %vm1070, %v1548, -inf
        %v1554 = vsel %vm1070, %v1549, -inf
        %v1555 = vsel %vm1070, %v1550, -inf
        %v1556 = vsel %vm1070, %v1551, -inf
        %v1557 = vsel %vm1070, %v1552, -inf
        %v1558 = vmax.f32 %v1553, %v1557
        %v1559 = vmax.f32 %v1558, %v1554
        %v1560 = vmax.f32 %v1555, %v1556
        %v1561 = vmax.f32 %v1559, %v1560
        %v1562 = vrot.slane %v1561, 4
        %v1563 = vmax.f32 %v1561, %v1562
        %v1564 = vrot.slane %v1563, 2
        %v1565 = vmax.f32 %v1563, %v1564
        %v1566 = vrot.slane %v1565, 1
        %v1567 = vmax.f32 %v1565, %v1566
        %1568 = vset.pattern.permute.xlu0 1
        %1569 = vperm.xlu0 %1568, %v1503
        %v1570 = vpop.permute.xlu0 %1569
        %1572 = vset.pattern.permute.xlu0 1
        %1573 = vperm.xlu0 %1572, %v1504
        %v1574 = vpop.permute.xlu0 %1573
        %1576 = vset.pattern.permute.xlu0 1
        %1577 = vperm.xlu0 %1576, %v1505
        %v1578 = vpop.permute.xlu0 %1577
        %1580 = vset.pattern.permute.xlu0 1
        %1581 = vperm.xlu0 %1580, %v1506
        %v1582 = vpop.permute.xlu0 %1581
        %1584 = vset.pattern.permute.xlu0 1
        %1585 = vperm.xlu0 %1584, %v1507
        %v1586 = vpop.permute.xlu0 %1585
        %v1588 = vmul.f32 %v1570, %v818
        %v1589 = vmul.f32 %v1574, %v819
        %v1590 = vmul.f32 %v1578, %v820
        %v1591 = vmul.f32 %v1582, %v821
        %v1592 = vmul.f32 %v1586, %v822
        %v1593 = vadd.f32 %v1588, %v1513
        %v1594 = vadd.f32 %v1589, %v1514
        %v1595 = vadd.f32 %v1590, %v1515
        %v1596 = vadd.f32 %v1591, %v1516
        %v1597 = vadd.f32 %v1592, %v1517
        %v1598 = vsel %vm1070, %v1593, -inf
        %v1599 = vsel %vm1070, %v1594, -inf
        %v1600 = vsel %vm1070, %v1595, -inf
        %v1601 = vsel %vm1070, %v1596, -inf
        %v1602 = vsel %vm1070, %v1597, -inf
        %v1603 = vmax.f32 %v1598, %v1602
        %v1604 = vmax.f32 %v1603, %v1599
        %v1605 = vmax.f32 %v1600, %v1601
        %v1606 = vmax.f32 %v1604, %v1605
        %v1607 = vrot.slane %v1606, 4
        %v1608 = vmax.f32 %v1606, %v1607
        %v1609 = vrot.slane %v1608, 2
        %v1610 = vmax.f32 %v1608, %v1609
        %v1611 = vrot.slane %v1610, 1
        %v1612 = vmax.f32 %v1610, %v1611
        %1613 = vset.pattern.permute.xlu0 2
        %1614 = vperm.xlu0 %1613, %v1503
        %v1615 = vpop.permute.xlu0 %1614
        %1617 = vset.pattern.permute.xlu0 2
        %1618 = vperm.xlu0 %1617, %v1504
        %v1619 = vpop.permute.xlu0 %1618
        %1621 = vset.pattern.permute.xlu0 2
        %1622 = vperm.xlu0 %1621, %v1505
        %v1623 = vpop.permute.xlu0 %1622
        %1625 = vset.pattern.permute.xlu0 2
        %1626 = vperm.xlu0 %1625, %v1506
        %v1627 = vpop.permute.xlu0 %1626
        %1629 = vset.pattern.permute.xlu0 2
        %1630 = vperm.xlu0 %1629, %v1507
        %v1631 = vpop.permute.xlu0 %1630
        %v1633 = vmul.f32 %v1615, %v818
        %v1634 = vmul.f32 %v1619, %v819
        %v1635 = vmul.f32 %v1623, %v820
        %v1636 = vmul.f32 %v1627, %v821
        %v1637 = vmul.f32 %v1631, %v822
        %v1638 = vadd.f32 %v1633, %v1513
        %v1639 = vadd.f32 %v1634, %v1514
        %v1640 = vadd.f32 %v1635, %v1515
        %v1641 = vadd.f32 %v1636, %v1516
        %v1642 = vadd.f32 %v1637, %v1517
        %v1643 = vsel %vm1070, %v1638, -inf
        %v1644 = vsel %vm1070, %v1639, -inf
        %v1645 = vsel %vm1070, %v1640, -inf
        %v1646 = vsel %vm1070, %v1641, -inf
        %v1647 = vsel %vm1070, %v1642, -inf
        %v1648 = vmax.f32 %v1643, %v1647
        %v1649 = vmax.f32 %v1648, %v1644
        %v1650 = vmax.f32 %v1645, %v1646
        %v1651 = vmax.f32 %v1649, %v1650
        %v1652 = vrot.slane %v1651, 4
        %v1653 = vmax.f32 %v1651, %v1652
        %v1654 = vrot.slane %v1653, 2
        %v1655 = vmax.f32 %v1653, %v1654
        %v1656 = vrot.slane %v1655, 1
        %v1657 = vmax.f32 %v1655, %v1656
        %1658 = vset.pattern.permute.xlu0 3
        %1659 = vperm.xlu0 %1658, %v1503
        %v1660 = vpop.permute.xlu0 %1659
        %1662 = vset.pattern.permute.xlu0 3
        %1663 = vperm.xlu0 %1662, %v1504
        %v1664 = vpop.permute.xlu0 %1663
        %1666 = vset.pattern.permute.xlu0 3
        %1667 = vperm.xlu0 %1666, %v1505
        %v1668 = vpop.permute.xlu0 %1667
        %1670 = vset.pattern.permute.xlu0 3
        %1671 = vperm.xlu0 %1670, %v1506
        %v1672 = vpop.permute.xlu0 %1671
        %1674 = vset.pattern.permute.xlu0 3
        %1675 = vperm.xlu0 %1674, %v1507
        %v1676 = vpop.permute.xlu0 %1675
        %v1678 = vmul.f32 %v1660, %v818
        %v1679 = vmul.f32 %v1664, %v819
        %v1680 = vmul.f32 %v1668, %v820
        %v1681 = vmul.f32 %v1672, %v821
        %v1682 = vmul.f32 %v1676, %v822
        %v1683 = vadd.f32 %v1678, %v1513
        %v1684 = vadd.f32 %v1679, %v1514
        %v1685 = vadd.f32 %v1680, %v1515
        %v1686 = vadd.f32 %v1681, %v1516
        %v1687 = vadd.f32 %v1682, %v1517
        %v1688 = vsel %vm1070, %v1683, -inf
        %v1689 = vsel %vm1070, %v1684, -inf
        %v1690 = vsel %vm1070, %v1685, -inf
        %v1691 = vsel %vm1070, %v1686, -inf
        %v1692 = vsel %vm1070, %v1687, -inf
        %v1693 = vmax.f32 %v1688, %v1692
        %v1694 = vmax.f32 %v1693, %v1689
        %v1695 = vmax.f32 %v1690, %v1691
        %v1696 = vmax.f32 %v1694, %v1695
        %v1697 = vrot.slane %v1696, 4
        %v1698 = vmax.f32 %v1696, %v1697
        %v1699 = vrot.slane %v1698, 2
        %v1700 = vmax.f32 %v1698, %v1699
        %v1701 = vrot.slane %v1700, 1
        %v1702 = vmax.f32 %v1700, %v1701
        %vm1703 = vcmask 1040384
        %v1704 = vsel %vm1703, %v1567, %v1612
        %vm1705 = vcmask 1041408
        %v1706 = vsel %vm1705, %v1704, %v1657
        %vm1707 = vcmask 1042432
        %v1708 = vsel %vm1707, %v1706, %v1702
        %v1710 = vsel %vm1070, %v1708, 0
        %1712 = vmatprep.subr.mxu0 0.0
        %1713 = vmatpush1.xpose.msra.mxu0 0.0
        %1714 = vmatprep.subr.mxu0 0.0
        %1715 = vmatpush1.xpose.msra.mxu0 0.0
        %1716 = vmatprep.subr.mxu0 0.0
        %1717 = vmatpush1.xpose.msra.mxu0 0.0
        %1718 = vmatprep.subr.mxu0 0.0
        %1719 = vmatpush1.xpose.msra.mxu0 0.0
        %1720 = vmatprep.subr.mxu0 0.0
        %1721 = vmatpush1.xpose.msra.mxu0 0.0
        %1722 = vmatprep.subr.mxu0 0.0
        %1723 = vmatpush1.xpose.msra.mxu0 0.0
        %1724 = vmatprep.subr.mxu0 0.0
        %1725 = vmatpush1.xpose.msra.mxu0 0.0
        %1726 = vmatprep.subr.mxu0 0.0
        %1727 = vmatpush1.xpose.msra.mxu0 0.0
        %1728 = vmatprep.subr.mxu0 0.0
        %1729 = vmatpush1.xpose.msra.mxu0 0.0
        %1730 = vmatprep.subr.mxu0 0.0
        %1731 = vmatpush1.xpose.msra.mxu0 0.0
        %1732 = vmatprep.subr.mxu0 0.0
        %1733 = vmatpush1.xpose.msra.mxu0 0.0
        %1734 = vmatprep.subr.mxu0 0.0
        %1735 = vmatpush1.xpose.msra.mxu0 0.0
        %1736 = vmatprep.subr.mxu0 0.0
        %1737 = vmatpush1.xpose.msra.mxu0 0.0
        %1738 = vmatprep.subr.mxu0 0.0
        %1739 = vmatpush1.xpose.msra.mxu0 0.0
        %1740 = vmatprep.subr.mxu0 0.0
        %1741 = vmatpush1.xpose.msra.mxu0 0.0
        %1742 = vmatprep.subr.mxu0 0.0
        %1743 = vmatpush1.xpose.msra.mxu0 %v1710
        %1744 = vmatprep.subr.mxu0 0.0
        %1745 = vmatpush2.xpose.msra.mxu0 0.0
        %1746 = vmatprep.subr.mxu0 0.0
        %1747 = vmatpush2.xpose.msra.mxu0 0.0
        %1748 = vmatprep.subr.mxu0 0.0
        %1749 = vmatpush2.xpose.msra.mxu0 0.0
        %1750 = vmatprep.subr.mxu0 0.0
        %1751 = vmatpush2.xpose.msra.mxu0 0.0
        %1752 = vmatprep.subr.mxu0 0.0
        %1753 = vmatpush2.xpose.msra.mxu0 0.0
        %1754 = vmatprep.subr.mxu0 0.0
        %1755 = vmatpush2.xpose.msra.mxu0 0.0
        %1756 = vmatprep.subr.mxu0 0.0
        %1757 = vmatpush2.xpose.msra.mxu0 0.0
        %1758 = vmatprep.subr.mxu0 0.0
        %1759 = vmatpush2.xpose.msra.mxu0 0.0
        %1760 = vmatprep.subr.mxu0 0.0
        %1761 = vmatpush2.xpose.msra.mxu0 0.0
        %1762 = vmatprep.subr.mxu0 0.0
        %1763 = vmatpush2.xpose.msra.mxu0 0.0
        %1764 = vmatprep.subr.mxu0 0.0
        %1765 = vmatpush2.xpose.msra.mxu0 0.0
        %1766 = vmatprep.subr.mxu0 0.0
        %1767 = vmatpush2.xpose.msra.mxu0 0.0
        %1768 = vmatprep.subr.mxu0 0.0
        %1769 = vmatpush2.xpose.msra.mxu0 0.0
        %1770 = vmatprep.subr.mxu0 0.0
        %1771 = vmatpush2.xpose.msra.mxu0 0.0
        %1772 = vmatprep.subr.mxu0 0.0
        %1773 = vmatpush2.xpose.msra.mxu0 0.0
        %1774 = vmatprep.subr.mxu0 0.0
        %1775 = vmatpush2.xpose.msra.mxu0 0.0
        %1776 = vmatprep.mubr.f32.mxu0 0.0
        %1777 = vmatmul.mubr.f32.gmra.mxu0 %v1072
        %v1778 = vpop.f32.mrf.mxu0
        %v1779 = vadd.f32 0.0, %v1778
        %v1780 = vpop.f32.mrf.mxu0
        %1781 = vmatprep.mubr.f32.mxu0 0.0
        %1782 = vmatmul.mubr.f32.gmra.mxu0 %v1075
        %v1783 = vpop.f32.mrf.mxu0
        %v1784 = vadd.f32 0.0, %v1783
        %v1785 = vpop.f32.mrf.mxu0
        %1786 = vmatprep.mubr.f32.mxu0 0.0
        %1787 = vmatmul.mubr.f32.gmra.mxu0 %v1078
        %v1788 = vpop.f32.mrf.mxu0
        %v1789 = vadd.f32 0.0, %v1788
        %v1790 = vpop.f32.mrf.mxu0
        %1791 = vmatprep.mubr.f32.mxu0 0.0
        %1792 = vmatmul.mubr.f32.gmra.mxu0 %v1081
        %v1793 = vpop.f32.mrf.mxu0
        %v1794 = vadd.f32 0.0, %v1793
        %v1795 = vpop.f32.mrf.mxu0
        %1796 = vmatprep.mubr.f32.mxu0 0.0
        %1797 = vmatmul.mubr.f32.gmra.mxu0 %v1084
        %v1798 = vpop.f32.mrf.mxu0
        %v1799 = vadd.f32 0.0, %v1798
        %v1800 = vpop.f32.mrf.mxu0
        %1801 = vdwg.mxu0
        %v1802 = vsub.f32 %v1503, %v1779
        %v1803 = vsub.f32 %v1504, %v1784
        %v1804 = vsub.f32 %v1505, %v1789
        %v1805 = vsub.f32 %v1506, %v1794
        %v1806 = vsub.f32 %v1507, %v1799
        %v1807 = vmul.f32 %v1802, 1.442695
        %v1808 = vpow.pop %v1807
        %v1809 = vmul.f32 %v1803, 1.442695
        %v1810 = vpow.pop %v1809
        %v1811 = vmul.f32 %v1804, 1.442695
        %v1812 = vpow.pop %v1811
        %v1813 = vmul.f32 %v1805, 1.442695
        %v1814 = vpow.pop %v1813
        %v1815 = vmul.f32 %v1806, 1.442695
        %v1816 = vpow.pop %v1815
        %1817 = vxpose.xlu0.b32.start [1/16] %v818, 128
        %1818 = vxpose.xlu0.b32.cont [2/16] %v819, 128
        %1819 = vxpose.xlu0.b32.cont [3/16] %v820, 128
        %1820 = vxpose.xlu0.b32.cont [4/16] %v821, 128
        %1821 = vxpose.xlu0.b32.cont [5/16] %v822, 128
        %1822 = vxpose.xlu0.b32.cont [6/16] 0.0, 128
        %1823 = vxpose.xlu0.b32.cont [7/16] 0.0, 128
        %1824 = vxpose.xlu0.b32.cont [8/16] 0.0, 128
        %1825 = vxpose.xlu0.b32.cont [9/16] 0.0, 128
        %1826 = vxpose.xlu0.b32.cont [10/16] 0.0, 128
        %1827 = vxpose.xlu0.b32.cont [11/16] 0.0, 128
        %1828 = vxpose.xlu0.b32.cont [12/16] 0.0, 128
        %1829 = vxpose.xlu0.b32.cont [13/16] 0.0, 128
        %1830 = vxpose.xlu0.b32.cont [14/16] 0.0, 128
        %1831 = vxpose.xlu0.b32.cont [15/16] 0.0, 128
        %1832 = vxpose.xlu0.b32.end [16/16] 0.0, 128
        %v1833 = vpop.trf.xlu0
        %v1834 = vpop.trf.xlu0
        %v1835 = vpop.trf.xlu0
        %v1836 = vpop.trf.xlu0
        %v1837 = vpop.trf.xlu0
        %v1838 = vpop.trf.xlu0
        %v1839 = vpop.trf.xlu0
        %v1840 = vpop.trf.xlu0
        %v1841 = vpop.trf.xlu0
        %v1842 = vpop.trf.xlu0
        %v1843 = vpop.trf.xlu0
        %v1844 = vpop.trf.xlu0
        %v1845 = vpop.trf.xlu0
        %v1846 = vpop.trf.xlu0
        %v1847 = vpop.trf.xlu0
        %v1848 = vpop.trf.xlu0
        %vm1849 = vcmask 326656
        %v1851 = vsel %vm1849, %v1833, 0
        %v1854 = vsel %vm1849, %v1834, 0
        %1856 = vmatprep.subr.mxu0 0.0
        %1857 = vmatpush1.msra.mxu0 0.0
        %1858 = vmatprep.subr.mxu0 0.0
        %1859 = vmatpush1.msra.mxu0 0.0
        %1860 = vmatprep.subr.mxu0 0.0
        %1861 = vmatpush1.msra.mxu0 0.0
        %1862 = vmatprep.subr.mxu0 0.0
        %1863 = vmatpush1.msra.mxu0 0.0
        %1864 = vmatprep.subr.mxu0 0.0
        %1865 = vmatpush1.msra.mxu0 0.0
        %1866 = vmatprep.subr.mxu0 0.0
        %1867 = vmatpush1.msra.mxu0 0.0
        %1868 = vmatprep.subr.mxu0 0.0
        %1869 = vmatpush1.msra.mxu0 0.0
        %1870 = vmatprep.subr.mxu0 0.0
        %1871 = vmatpush1.msra.mxu0 0.0
        %1872 = vmatprep.subr.mxu0 0.0
        %1873 = vmatpush1.msra.mxu0 0.0
        %1874 = vmatprep.subr.mxu0 0.0
        %1875 = vmatpush1.msra.mxu0 0.0
        %1876 = vmatprep.subr.mxu0 0.0
        %1877 = vmatpush1.msra.mxu0 0.0
        %1878 = vmatprep.subr.mxu0 0.0
        %1879 = vmatpush1.msra.mxu0 %v1816
        %1880 = vmatprep.subr.mxu0 0.0
        %1881 = vmatpush1.msra.mxu0 %v1814
        %1882 = vmatprep.subr.mxu0 0.0
        %1883 = vmatpush1.msra.mxu0 %v1812
        %1884 = vmatprep.subr.mxu0 0.0
        %1885 = vmatpush1.msra.mxu0 %v1810
        %1886 = vmatprep.subr.mxu0 0.0
        %1887 = vmatpush1.msra.mxu0 %v1808
        %1888 = vmatprep.subr.mxu0 0.0
        %1889 = vmatpush2.msra.mxu0 0.0
        %1890 = vmatprep.subr.mxu0 0.0
        %1891 = vmatpush2.msra.mxu0 0.0
        %1892 = vmatprep.subr.mxu0 0.0
        %1893 = vmatpush2.msra.mxu0 0.0
        %1894 = vmatprep.subr.mxu0 0.0
        %1895 = vmatpush2.msra.mxu0 0.0
        %1896 = vmatprep.subr.mxu0 0.0
        %1897 = vmatpush2.msra.mxu0 0.0
        %1898 = vmatprep.subr.mxu0 0.0
        %1899 = vmatpush2.msra.mxu0 0.0
        %1900 = vmatprep.subr.mxu0 0.0
        %1901 = vmatpush2.msra.mxu0 0.0
        %1902 = vmatprep.subr.mxu0 0.0
        %1903 = vmatpush2.msra.mxu0 0.0
        %1904 = vmatprep.subr.mxu0 0.0
        %1905 = vmatpush2.msra.mxu0 0.0
        %1906 = vmatprep.subr.mxu0 0.0
        %1907 = vmatpush2.msra.mxu0 0.0
        %1908 = vmatprep.subr.mxu0 0.0
        %1909 = vmatpush2.msra.mxu0 0.0
        %1910 = vmatprep.subr.mxu0 0.0
        %1911 = vmatpush2.msra.mxu0 0.0
        %1912 = vmatprep.subr.mxu0 0.0
        %1913 = vmatpush2.msra.mxu0 0.0
        %1914 = vmatprep.subr.mxu0 0.0
        %1915 = vmatpush2.msra.mxu0 0.0
        %1916 = vmatprep.subr.mxu0 0.0
        %1917 = vmatpush2.msra.mxu0 0.0
        %1918 = vmatprep.subr.mxu0 0.0
        %1919 = vmatpush2.msra.mxu0 0.0
        %1920 = vmatprep.mubr.f32.mxu0 0.0
        %1921 = vmatmul.mubr.f32.gmra.mxu0 %v1851
        %v1922 = vpop.f32.mrf.mxu0
        %v1923 = vadd.f32 0.0, %v1922
        %v1924 = vpop.f32.mrf.mxu0
        %1925 = vmatprep.mubr.f32.mxu0 0.0
        %1926 = vmatmul.mubr.f32.gmra.mxu0 %v1854
        %v1927 = vpop.f32.mrf.mxu0
        %v1928 = vadd.f32 0.0, %v1927
        %v1929 = vpop.f32.mrf.mxu0
        %1930 = vdwg.mxu0
        %1931 = vmatprep.subr.mxu0 0.0
        %1932 = vmatpush1.msra.mxu0 0.0
        %1933 = vmatprep.subr.mxu0 0.0
        %1934 = vmatpush1.msra.mxu0 0.0
        %1935 = vmatprep.subr.mxu0 0.0
        %1936 = vmatpush1.msra.mxu0 0.0
        %1937 = vmatprep.subr.mxu0 0.0
        %1938 = vmatpush1.msra.mxu0 0.0
        %1939 = vmatprep.subr.mxu0 0.0
        %1940 = vmatpush1.msra.mxu0 0.0
        %1941 = vmatprep.subr.mxu0 0.0
        %1942 = vmatpush1.msra.mxu0 0.0
        %1943 = vmatprep.subr.mxu0 0.0
        %1944 = vmatpush1.msra.mxu0 0.0
        %1945 = vmatprep.subr.mxu0 0.0
        %1946 = vmatpush1.msra.mxu0 0.0
        %1947 = vmatprep.subr.mxu0 0.0
        %1948 = vmatpush1.msra.mxu0 0.0
        %1949 = vmatprep.subr.mxu0 0.0
        %1950 = vmatpush1.msra.mxu0 0.0
        %1951 = vmatprep.subr.mxu0 0.0
        %1952 = vmatpush1.msra.mxu0 0.0
        %1953 = vmatprep.subr.mxu0 0.0
        %1954 = vmatpush1.msra.mxu0 0.0
        %1955 = vmatprep.subr.mxu0 0.0
        %1956 = vmatpush1.msra.mxu0 0.0
        %1957 = vmatprep.subr.mxu0 0.0
        %1958 = vmatpush1.msra.mxu0 0.0
        %1959 = vmatprep.subr.mxu0 0.0
        %1960 = vmatpush1.msra.mxu0 %v1928
        %1961 = vmatprep.subr.mxu0 0.0
        %1962 = vmatpush1.msra.mxu0 %v1923
        %1963 = vmatprep.subr.mxu0 0.0
        %1964 = vmatpush2.msra.mxu0 0.0
        %1965 = vmatprep.subr.mxu0 0.0
        %1966 = vmatpush2.msra.mxu0 0.0
        %1967 = vmatprep.subr.mxu0 0.0
        %1968 = vmatpush2.msra.mxu0 0.0
        %1969 = vmatprep.subr.mxu0 0.0
        %1970 = vmatpush2.msra.mxu0 0.0
        %1971 = vmatprep.subr.mxu0 0.0
        %1972 = vmatpush2.msra.mxu0 0.0
        %1973 = vmatprep.subr.mxu0 0.0
        %1974 = vmatpush2.msra.mxu0 0.0
        %1975 = vmatprep.subr.mxu0 0.0
        %1976 = vmatpush2.msra.mxu0 0.0
        %1977 = vmatprep.subr.mxu0 0.0
        %1978 = vmatpush2.msra.mxu0 0.0
        %1979 = vmatprep.subr.mxu0 0.0
        %1980 = vmatpush2.msra.mxu0 0.0
        %1981 = vmatprep.subr.mxu0 0.0
        %1982 = vmatpush2.msra.mxu0 0.0
        %1983 = vmatprep.subr.mxu0 0.0
        %1984 = vmatpush2.msra.mxu0 0.0
        %1985 = vmatprep.subr.mxu0 0.0
        %1986 = vmatpush2.msra.mxu0 0.0
        %1987 = vmatprep.subr.mxu0 0.0
        %1988 = vmatpush2.msra.mxu0 0.0
        %1989 = vmatprep.subr.mxu0 0.0
        %1990 = vmatpush2.msra.mxu0 0.0
        %1991 = vmatprep.subr.mxu0 0.0
        %1992 = vmatpush2.msra.mxu0 0.0
        %1993 = vmatprep.subr.mxu0 0.0
        %1994 = vmatpush2.msra.mxu0 0.0
        %1995 = vmatprep.mubr.f32.mxu0 0.0
        %1996 = vmatmul.mubr.f32.gmra.mxu0 %v1072
        %v1997 = vpop.f32.mrf.mxu0
        %v1998 = vadd.f32 1e-16, %v1997
        %v1999 = vpop.f32.mrf.mxu0
        %2000 = vmatprep.mubr.f32.mxu0 0.0
        %2001 = vmatmul.mubr.f32.gmra.mxu0 %v1075
        %v2002 = vpop.f32.mrf.mxu0
        %v2003 = vadd.f32 1e-16, %v2002
        %v2004 = vpop.f32.mrf.mxu0
        %2005 = vmatprep.mubr.f32.mxu0 0.0
        %2006 = vmatmul.mubr.f32.gmra.mxu0 %v1078
        %v2007 = vpop.f32.mrf.mxu0
        %v2008 = vadd.f32 1e-16, %v2007
        %v2009 = vpop.f32.mrf.mxu0
        %2010 = vmatprep.mubr.f32.mxu0 0.0
        %2011 = vmatmul.mubr.f32.gmra.mxu0 %v1081
        %v2012 = vpop.f32.mrf.mxu0
        %v2013 = vadd.f32 1e-16, %v2012
        %v2014 = vpop.f32.mrf.mxu0
        %2015 = vmatprep.mubr.f32.mxu0 0.0
        %2016 = vmatmul.mubr.f32.gmra.mxu0 %v1084
        %v2017 = vpop.f32.mrf.mxu0
        %v2018 = vadd.f32 1e-16, %v2017
        %v2019 = vpop.f32.mrf.mxu0
        %2020 = vdwg.mxu0
        %v2021 = vrcp.pop %v1998
        %v2022 = vrcp.pop %v2003
        %v2023 = vrcp.pop %v2008
        %v2024 = vrcp.pop %v2013
        %v2025 = vrcp.pop %v2018
        %v2026 = vmul.f32 %v1808, %v2021
        %v2027 = vmul.f32 %v1810, %v2022
        %v2028 = vmul.f32 %v1812, %v2023
        %v2029 = vmul.f32 %v1814, %v2024
        %v2030 = vmul.f32 %v1816, %v2025
        %v2031 = vld [vmem:[%s5] sm:$0xf]
        %vm2032 = vcmask 31744
        %v2034 = vsel %vm2032, %v2026, 0
        %v2037 = vsel %vm2032, %v2027, 0
        %v2040 = vsel %vm2032, %v2028, 0
        %v2043 = vsel %vm2032, %v2029, 0
        %v2046 = vsel %vm2032, %v2030, 0
        %vm2048 = vcmask 1043456
        %v2050 = vsel %vm2048, %v2031, 0
        %2052 = vmatprep.subr.mxu0 0.0
        %2053 = vmatpush1.msra.mxu0 0.0
        %2054 = vmatprep.subr.mxu0 0.0
        %2055 = vmatpush1.msra.mxu0 0.0
        %2056 = vmatprep.subr.mxu0 0.0
        %2057 = vmatpush1.msra.mxu0 0.0
        %2058 = vmatprep.subr.mxu0 0.0
        %2059 = vmatpush1.msra.mxu0 0.0
        %2060 = vmatprep.subr.mxu0 0.0
        %2061 = vmatpush1.msra.mxu0 0.0
        %2062 = vmatprep.subr.mxu0 0.0
        %2063 = vmatpush1.msra.mxu0 0.0
        %2064 = vmatprep.subr.mxu0 0.0
        %2065 = vmatpush1.msra.mxu0 0.0
        %2066 = vmatprep.subr.mxu0 0.0
        %2067 = vmatpush1.msra.mxu0 0.0
        %2068 = vmatprep.subr.mxu0 0.0
        %2069 = vmatpush1.msra.mxu0 0.0
        %2070 = vmatprep.subr.mxu0 0.0
        %2071 = vmatpush1.msra.mxu0 0.0
        %2072 = vmatprep.subr.mxu0 0.0
        %2073 = vmatpush1.msra.mxu0 0.0
        %2074 = vmatprep.subr.mxu0 0.0
        %2075 = vmatpush1.msra.mxu0 0.0
        %2076 = vmatprep.subr.mxu0 0.0
        %2077 = vmatpush1.msra.mxu0 0.0
        %2078 = vmatprep.subr.mxu0 0.0
        %2079 = vmatpush1.msra.mxu0 0.0
        %2080 = vmatprep.subr.mxu0 0.0
        %2081 = vmatpush1.msra.mxu0 0.0
        %2082 = vmatprep.subr.mxu0 0.0
        %2083 = vmatpush1.msra.mxu0 %v2050
        %2084 = vmatprep.subr.mxu0 0.0
        %2085 = vmatpush2.msra.mxu0 0.0
        %2086 = vmatprep.subr.mxu0 0.0
        %2087 = vmatpush2.msra.mxu0 0.0
        %2088 = vmatprep.subr.mxu0 0.0
        %2089 = vmatpush2.msra.mxu0 0.0
        %2090 = vmatprep.subr.mxu0 0.0
        %2091 = vmatpush2.msra.mxu0 0.0
        %2092 = vmatprep.subr.mxu0 0.0
        %2093 = vmatpush2.msra.mxu0 0.0
        %2094 = vmatprep.subr.mxu0 0.0
        %2095 = vmatpush2.msra.mxu0 0.0
        %2096 = vmatprep.subr.mxu0 0.0
        %2097 = vmatpush2.msra.mxu0 0.0
        %2098 = vmatprep.subr.mxu0 0.0
        %2099 = vmatpush2.msra.mxu0 0.0
        %2100 = vmatprep.subr.mxu0 0.0
        %2101 = vmatpush2.msra.mxu0 0.0
        %2102 = vmatprep.subr.mxu0 0.0
        %2103 = vmatpush2.msra.mxu0 0.0
        %2104 = vmatprep.subr.mxu0 0.0
        %2105 = vmatpush2.msra.mxu0 0.0
        %2106 = vmatprep.subr.mxu0 0.0
        %2107 = vmatpush2.msra.mxu0 0.0
        %2108 = vmatprep.subr.mxu0 0.0
        %2109 = vmatpush2.msra.mxu0 0.0
        %2110 = vmatprep.subr.mxu0 0.0
        %2111 = vmatpush2.msra.mxu0 0.0
        %2112 = vmatprep.subr.mxu0 0.0
        %2113 = vmatpush2.msra.mxu0 0.0
        %2114 = vmatprep.subr.mxu0 0.0
        %2115 = vmatpush2.msra.mxu0 0.0
        %2116 = vmatprep.mubr.f32.mxu0 0.0
        %2117 = vmatmul.mubr.f32.gmra.mxu0 %v2034
        %v2118 = vpop.f32.mrf.mxu0
        %v2119 = vadd.f32 0.0, %v2118
        %v2120 = vpop.f32.mrf.mxu0
        %2121 = vmatprep.mubr.f32.mxu0 0.0
        %2122 = vmatmul.mubr.f32.gmra.mxu0 %v2037
        %v2123 = vpop.f32.mrf.mxu0
        %v2124 = vadd.f32 0.0, %v2123
        %v2125 = vpop.f32.mrf.mxu0
        %2126 = vmatprep.mubr.f32.mxu0 0.0
        %2127 = vmatmul.mubr.f32.gmra.mxu0 %v2040
        %v2128 = vpop.f32.mrf.mxu0
        %v2129 = vadd.f32 0.0, %v2128
        %v2130 = vpop.f32.mrf.mxu0
        %2131 = vmatprep.mubr.f32.mxu0 0.0
        %2132 = vmatmul.mubr.f32.gmra.mxu0 %v2043
        %v2133 = vpop.f32.mrf.mxu0
        %v2134 = vadd.f32 0.0, %v2133
        %v2135 = vpop.f32.mrf.mxu0
        %2136 = vmatprep.mubr.f32.mxu0 0.0
        %2137 = vmatmul.mubr.f32.gmra.mxu0 %v2046
        %v2138 = vpop.f32.mrf.mxu0
        %v2139 = vadd.f32 0.0, %v2138
        %v2140 = vpop.f32.mrf.mxu0
        %2141 = vdwg.mxu0
        %v2142 = vmul.f32 %v1153, %v2119
        %v2143 = vmul.f32 %v1158, %v2124
        %v2144 = vmul.f32 %v1163, %v2129
        %v2145 = vmul.f32 %v1168, %v2134
        %v2146 = vmul.f32 %v1173, %v2139
        %2147 = vxpose.xlu0.b32.start [1/16] %v823, 128
        %2148 = vxpose.xlu0.b32.cont [2/16] %v824, 128
        %2149 = vxpose.xlu0.b32.cont [3/16] %v825, 128
        %2150 = vxpose.xlu0.b32.cont [4/16] %v826, 128
        %2151 = vxpose.xlu0.b32.cont [5/16] %v827, 128
        %2152 = vxpose.xlu0.b32.cont [6/16] 0.0, 128
        %2153 = vxpose.xlu0.b32.cont [7/16] 0.0, 128
        %2154 = vxpose.xlu0.b32.cont [8/16] 0.0, 128
        %2155 = vxpose.xlu0.b32.cont [9/16] 0.0, 128
        %2156 = vxpose.xlu0.b32.cont [10/16] 0.0, 128
        %2157 = vxpose.xlu0.b32.cont [11/16] 0.0, 128
        %2158 = vxpose.xlu0.b32.cont [12/16] 0.0, 128
        %2159 = vxpose.xlu0.b32.cont [13/16] 0.0, 128
        %2160 = vxpose.xlu0.b32.cont [14/16] 0.0, 128
        %2161 = vxpose.xlu0.b32.cont [15/16] 0.0, 128
        %2162 = vxpose.xlu0.b32.end [16/16] 0.0, 128
        %v2163 = vpop.trf.xlu0
        %v2164 = vpop.trf.xlu0
        %v2165 = vpop.trf.xlu0
        %v2166 = vpop.trf.xlu0
        %v2167 = vpop.trf.xlu0
        %v2168 = vpop.trf.xlu0
        %v2169 = vpop.trf.xlu0
        %v2170 = vpop.trf.xlu0
        %v2171 = vpop.trf.xlu0
        %v2172 = vpop.trf.xlu0
        %v2173 = vpop.trf.xlu0
        %v2174 = vpop.trf.xlu0
        %v2175 = vpop.trf.xlu0
        %v2176 = vpop.trf.xlu0
        %v2177 = vpop.trf.xlu0
        %v2178 = vpop.trf.xlu0
        %v2180 = vsel %vm1849, %v2163, 0
        %v2183 = vsel %vm1849, %v2164, 0
        %2185 = vmatprep.subr.mxu0 0.0
        %2186 = vmatpush1.msra.mxu0 0.0
        %2187 = vmatprep.subr.mxu0 0.0
        %2188 = vmatpush1.msra.mxu0 0.0
        %2189 = vmatprep.subr.mxu0 0.0
        %2190 = vmatpush1.msra.mxu0 0.0
        %2191 = vmatprep.subr.mxu0 0.0
        %2192 = vmatpush1.msra.mxu0 0.0
        %2193 = vmatprep.subr.mxu0 0.0
        %2194 = vmatpush1.msra.mxu0 0.0
        %2195 = vmatprep.subr.mxu0 0.0
        %2196 = vmatpush1.msra.mxu0 0.0
        %2197 = vmatprep.subr.mxu0 0.0
        %2198 = vmatpush1.msra.mxu0 0.0
        %2199 = vmatprep.subr.mxu0 0.0
        %2200 = vmatpush1.msra.mxu0 0.0
        %2201 = vmatprep.subr.mxu0 0.0
        %2202 = vmatpush1.msra.mxu0 0.0
        %2203 = vmatprep.subr.mxu0 0.0
        %2204 = vmatpush1.msra.mxu0 0.0
        %2205 = vmatprep.subr.mxu0 0.0
        %2206 = vmatpush1.msra.mxu0 0.0
        %2207 = vmatprep.subr.mxu0 0.0
        %2208 = vmatpush1.msra.mxu0 %v2146
        %2209 = vmatprep.subr.mxu0 0.0
        %2210 = vmatpush1.msra.mxu0 %v2145
        %2211 = vmatprep.subr.mxu0 0.0
        %2212 = vmatpush1.msra.mxu0 %v2144
        %2213 = vmatprep.subr.mxu0 0.0
        %2214 = vmatpush1.msra.mxu0 %v2143
        %2215 = vmatprep.subr.mxu0 0.0
        %2216 = vmatpush1.msra.mxu0 %v2142
        %2217 = vmatprep.subr.mxu0 0.0
        %2218 = vmatpush2.msra.mxu0 0.0
        %2219 = vmatprep.subr.mxu0 0.0
        %2220 = vmatpush2.msra.mxu0 0.0
        %2221 = vmatprep.subr.mxu0 0.0
        %2222 = vmatpush2.msra.mxu0 0.0
        %2223 = vmatprep.subr.mxu0 0.0
        %2224 = vmatpush2.msra.mxu0 0.0
        %2225 = vmatprep.subr.mxu0 0.0
        %2226 = vmatpush2.msra.mxu0 0.0
        %2227 = vmatprep.subr.mxu0 0.0
        %2228 = vmatpush2.msra.mxu0 0.0
        %2229 = vmatprep.subr.mxu0 0.0
        %2230 = vmatpush2.msra.mxu0 0.0
        %2231 = vmatprep.subr.mxu0 0.0
        %2232 = vmatpush2.msra.mxu0 0.0
        %2233 = vmatprep.subr.mxu0 0.0
        %2234 = vmatpush2.msra.mxu0 0.0
        %2235 = vmatprep.subr.mxu0 0.0
        %2236 = vmatpush2.msra.mxu0 0.0
        %2237 = vmatprep.subr.mxu0 0.0
        %2238 = vmatpush2.msra.mxu0 0.0
        %2239 = vmatprep.subr.mxu0 0.0
        %2240 = vmatpush2.msra.mxu0 0.0
        %2241 = vmatprep.subr.mxu0 0.0
        %2242 = vmatpush2.msra.mxu0 0.0
        %2243 = vmatprep.subr.mxu0 0.0
        %2244 = vmatpush2.msra.mxu0 0.0
        %2245 = vmatprep.subr.mxu0 0.0
        %2246 = vmatpush2.msra.mxu0 0.0
        %2247 = vmatprep.subr.mxu0 0.0
        %2248 = vmatpush2.msra.mxu0 0.0
        %2249 = vmatprep.mubr.f32.mxu0 0.0
        %2250 = vmatmul.mubr.f32.gmra.mxu0 %v2180
        %v2251 = vpop.f32.mrf.mxu0
        %v2252 = vadd.f32 0.0, %v2251
        %v2253 = vpop.f32.mrf.mxu0
        %2254 = vmatprep.mubr.f32.mxu0 0.0
        %2255 = vmatmul.mubr.f32.gmra.mxu0 %v2183
        %v2256 = vpop.f32.mrf.mxu0
        %v2257 = vadd.f32 0.0, %v2256
        %v2258 = vpop.f32.mrf.mxu0
        %2259 = vdwg.mxu0
        %v2260 = vld [vmem:[%s6] sm:$0xff]
        %v2261 = vld [vmem:[%s6 + $0x8] sm:$0xff]
        %v2262 = vld [vmem:[%s6 + $0x10] sm:$0xff]
        %v2263 = vld [vmem:[%s6 + $0x18] sm:$0xff]
        %v2264 = vld [vmem:[%s6 + $0x20] sm:$0xff]
        %v2265 = vld [vmem:[%s6 + $0x28] sm:$0xff]
        %v2266 = vld [vmem:[%s6 + $0x30] sm:$0xff]
        %v2267 = vld [vmem:[%s6 + $0x38] sm:$0xff]
        %v2268 = vld [vmem:[%s6 + $0x40] sm:$0xff]
        %v2269 = vld [vmem:[%s6 + $0x48] sm:$0xff]
        %v2270 = vld [vmem:[%s6 + $0x50] sm:$0xff]
        %v2271 = vld [vmem:[%s6 + $0x58] sm:$0xff]
        %v2272 = vld [vmem:[%s6 + $0x60] sm:$0xff]
        %v2273 = vld [vmem:[%s6 + $0x68] sm:$0xff]
        %v2274 = vld [vmem:[%s6 + $0x70] sm:$0xff]
        %v2275 = vld [vmem:[%s6 + $0x78] sm:$0xff]
        %v2276 = vld [vmem:[%s688] sm:$0x1]
        %v2278 = vlaneseq
        %v2279 = vshrl.u32 %v2278, 7
        %v2280 = vsub.s32 0, %v2279
        %v2281 = vrot.slane %v2276, %v2280
        %2283 = vmatprep.subr.mxu0 0.0
        %2284 = vmatpush1.msra.mxu0 %v2275
        %2285 = vmatprep.subr.mxu0 0.0
        %2286 = vmatpush1.msra.mxu0 %v2274
        %2287 = vmatprep.subr.mxu0 0.0
        %2288 = vmatpush1.msra.mxu0 %v2273
        %2289 = vmatprep.subr.mxu0 0.0
        %2290 = vmatpush1.msra.mxu0 %v2272
        %2291 = vmatprep.subr.mxu0 0.0
        %2292 = vmatpush1.msra.mxu0 %v2271
        %2293 = vmatprep.subr.mxu0 0.0
        %2294 = vmatpush1.msra.mxu0 %v2270
        %2295 = vmatprep.subr.mxu0 0.0
        %2296 = vmatpush1.msra.mxu0 %v2269
        %2297 = vmatprep.subr.mxu0 0.0
        %2298 = vmatpush1.msra.mxu0 %v2268
        %2299 = vmatprep.subr.mxu0 0.0
        %2300 = vmatpush1.msra.mxu0 %v2267
        %2301 = vmatprep.subr.mxu0 0.0
        %2302 = vmatpush1.msra.mxu0 %v2266
        %2303 = vmatprep.subr.mxu0 0.0
        %2304 = vmatpush1.msra.mxu0 %v2265
        %2305 = vmatprep.subr.mxu0 0.0
        %2306 = vmatpush1.msra.mxu0 %v2264
        %2307 = vmatprep.subr.mxu0 0.0
        %2308 = vmatpush1.msra.mxu0 %v2263
        %2309 = vmatprep.subr.mxu0 0.0
        %2310 = vmatpush1.msra.mxu0 %v2262
        %2311 = vmatprep.subr.mxu0 0.0
        %2312 = vmatpush1.msra.mxu0 %v2261
        %2313 = vmatprep.subr.mxu0 0.0
        %2314 = vmatpush1.msra.mxu0 %v2260
        %2315 = vmatprep.subr.mxu0 0.0
        %2316 = vmatpush2.msra.mxu0 0.0
        %2317 = vmatprep.subr.mxu0 0.0
        %2318 = vmatpush2.msra.mxu0 0.0
        %2319 = vmatprep.subr.mxu0 0.0
        %2320 = vmatpush2.msra.mxu0 0.0
        %2321 = vmatprep.subr.mxu0 0.0
        %2322 = vmatpush2.msra.mxu0 0.0
        %2323 = vmatprep.subr.mxu0 0.0
        %2324 = vmatpush2.msra.mxu0 0.0
        %2325 = vmatprep.subr.mxu0 0.0
        %2326 = vmatpush2.msra.mxu0 0.0
        %2327 = vmatprep.subr.mxu0 0.0
        %2328 = vmatpush2.msra.mxu0 0.0
        %2329 = vmatprep.subr.mxu0 0.0
        %2330 = vmatpush2.msra.mxu0 0.0
        %2331 = vmatprep.subr.mxu0 0.0
        %2332 = vmatpush2.msra.mxu0 0.0
        %2333 = vmatprep.subr.mxu0 0.0
        %2334 = vmatpush2.msra.mxu0 0.0
        %2335 = vmatprep.subr.mxu0 0.0
        %2336 = vmatpush2.msra.mxu0 0.0
        %2337 = vmatprep.subr.mxu0 0.0
        %2338 = vmatpush2.msra.mxu0 0.0
        %2339 = vmatprep.subr.mxu0 0.0
        %2340 = vmatpush2.msra.mxu0 0.0
        %2341 = vmatprep.subr.mxu0 0.0
        %2342 = vmatpush2.msra.mxu0 0.0
        %2343 = vmatprep.subr.mxu0 0.0
        %2344 = vmatpush2.msra.mxu0 0.0
        %2345 = vmatprep.subr.mxu0 0.0
        %2346 = vmatpush2.msra.mxu0 0.0
        %2347 = vmatprep.mubr.f32.mxu0 0.0
        %2348 = vmatmul.mubr.f32.gmra.mxu0 %v2252
        %v2349 = vpop.f32.mrf.mxu0
        %v2350 = vadd.f32 %v2281, %v2349
        %v2351 = vpop.f32.mrf.mxu0
        %2352 = vmatprep.mubr.f32.mxu0 0.0
        %2353 = vmatmul.mubr.f32.gmra.mxu0 %v2257
        %v2354 = vpop.f32.mrf.mxu0
        %v2355 = vadd.f32 %v2281, %v2354
        %v2356 = vpop.f32.mrf.mxu0
        %2357 = vdwg.mxu0
        %v2358 = vsel %vm839, %v2350, 0.0
        %2359 = vadd.xlane.f32.xlu0 %v2358
        %v2360 = vpop.xlane.xlu0 %2359
        %v2361 = vsel %vm839, %v2355, 0.0
        %2362 = vadd.xlane.f32.xlu0 %v2361
        %v2363 = vpop.xlane.xlu0 %2362
        %v2364 = vrcp.pop 32.0
        %v2365 = vmul.f32 %v2360, %v2364
        %v2366 = vmul.f32 %v2363, %v2364
        %v2367 = vsub.f32 %v2350, %v2365
        %v2368 = vsub.f32 %v2355, %v2366
        %v2369 = vmul.f32 %v2367, %v2367
        %v2370 = vmul.f32 %v2368, %v2368
        %v2371 = vsel %vm839, %v2369, 0.0
        %2372 = vadd.xlane.f32.xlu0 %v2371
        %v2373 = vpop.xlane.xlu0 %2372
        %v2374 = vsel %vm839, %v2370, 0.0
        %2375 = vadd.xlane.f32.xlu0 %v2374
        %v2376 = vpop.xlane.xlu0 %2375
        %v2377 = vmul.f32 %v2373, %v2364
        %v2378 = vmul.f32 %v2376, %v2364
        %v2379 = vadd.f32 %v2377, 1e-05
        %v2380 = vadd.f32 %v2378, 1e-05
        %v2381 = vrsqrt.pop %v2379
        %v2382 = vrsqrt.pop %v2380
        %v2383 = vmul.f32 %v2367, %v2381
        %v2384 = vmul.f32 %v2368, %v2382
        %v2385 = vld [vmem:[%s698] sm:$0x1]
        %v2387 = vlaneseq
        %v2388 = vshrl.u32 %v2387, 7
        %v2389 = vsub.s32 0, %v2388
        %v2390 = vrot.slane %v2385, %v2389
        %v2392 = vmul.f32 %v2383, %v2390
        %v2393 = vmul.f32 %v2384, %v2390
        %v2394 = vld [vmem:[%s701] sm:$0x1]
        %v2396 = vlaneseq
        %v2397 = vshrl.u32 %v2396, 7
        %v2398 = vsub.s32 0, %v2397
        %v2399 = vrot.slane %v2394, %v2398
        %v2401 = vadd.f32 %v2392, %v2399
        %v2402 = vadd.f32 %v2393, %v2399
        %p2403 = scmp.ne.s32.totalorder %s32, 1
        // Predicated region
        $region97: #{tpu_custom_call.1} parent=91 // pred_check
          %p2404 = pneg %p2403
        $region98: #{tpu_custom_call.1} parent=91 // pred_check_branch
          %2406 = sbr.rel (%p2404) target = $region100
        $region99: #{tpu_custom_call.1} parent=91 // pred_region
          %vm2407 = vcmp.gt.f32.partialorder %v2401, 0.0
          %vm2408 = vcmp.gt.f32.partialorder %v2402, 0.0
          %v2410 = vlaneseq
          %v2411 = vshrl.u32 %v2410, 7
          %v2412 = vsub.s32 0, %v2411
          %v2413 = vrot.slane %v705, %v2412
          %2414 = vset.pattern.permute.xlu0 0
          %2415 = vperm.xlu0 %2414, %v2413
          %v2416 = vpop.permute.xlu0 %2415
          %v2418 = vmul.f32 %v2416, %v2401
          %v2419 = vmul.f32 %v2416, %v2402
          %v2420 = vsel %vm2407, %v2401, %v2418
          %v2421 = vsel %vm2408, %v2402, %v2419
          %2422 = vst.msk [vmem:[#allocation3] sm:$0xff] %vm839, %v2420
          %2423 = vst.msk [vmem:[#allocation3 + $0x8] sm:$0xff] %vm839, %v2421
        $region100: #{tpu_custom_call.1} parent=91 // pred_fallthru
          _
        %p2424 = scmp.eq.s32.totalorder %s32, 1
        // Predicated region
        $region101: #{tpu_custom_call.1} parent=91 // pred_check
          %p2425 = pneg %p2424
        $region102: #{tpu_custom_call.1} parent=91 // pred_check_branch
          %2427 = sbr.rel (%p2425) target = $region104
        $region103: #{tpu_custom_call.1} parent=91 // pred_region
          %2428 = vst.msk [vmem:[#allocation3] sm:$0xff] %vm839, %v2401
          %2429 = vst.msk [vmem:[#allocation3 + $0x8] sm:$0xff] %vm839, %v2402
        $region104: #{tpu_custom_call.1} parent=91 // pred_fallthru
          _
        // Predicated region
        $region105: #{tpu_custom_call.1} parent=91 // pred_check
          %p2430 = pneg %p473
        $region106: #{tpu_custom_call.1} parent=91 // pred_check_branch
          %2432 = sbr.rel (%p2430) target = $region108
        $region107: #{tpu_custom_call.1} parent=91 // pred_region
          %s2434 = ssub.s32 256, 256
          %2435 = vsyncadd [#allocation4], %s2434
          %s2436 = sshll.u32 [#allocation3], 4
          %s2437 = int_to_ptr.vmem [resolvable:$true] %s2436
          %2442 = dma.vmem_to_hbm [thread:$0]  %s2437, 256, %s18, [#allocation4], 128, 128, 8
        $region108: #{tpu_custom_call.1} parent=91 // pred_fallthru
          _
        // Predicated region
        $region109: #{tpu_custom_call.1} parent=91 // pred_check
          %p2443 = pneg %p473
        $region110: #{tpu_custom_call.1} parent=91 // pred_check_branch
          %2445 = sbr.rel (%p2443) target = $region112
        $region111: #{tpu_custom_call.1} parent=91 // pred_region
          %2446 = dma.done [#allocation4], 256
        $region112: #{tpu_custom_call.1} parent=91 // pred_fallthru
          _
      $region92: #{tpu_custom_call.1} parent=5 // pred_fallthru
        _
      %p2447 = scmp.le.s32.totalorder 2, %s27
      // Predicated region
      $region113: #{tpu_custom_call.1} parent=5 // pred_check
        %p2448 = pneg %p2447
      $region114: #{tpu_custom_call.1} parent=5 // pred_check_branch
        %2450 = sbr.rel (%p2448) target = $region116
      $region115: #{tpu_custom_call.1} parent=5 // pred_region
        %s2451 = ssub.s32 %s27, 2
      $region116: #{tpu_custom_call.1} parent=5 // pred_fallthru
        _
    $region6: #{tpu_custom_call.1} parent=1 // loop_footer
      %s31 = sadd.s32 1, %s27
    $region7: #{tpu_custom_call.1} parent=1 // loop_footer_branch
      %26 = sbr.rel target = $region3
    $region8: #{tpu_custom_call.1} parent=1 // loop_exit
      _
    %2452 = vsyncpa [#allocation4], 1
    %s2453 = scalar_lea.sflag [#allocation4], 1
    %2454 = vsyncpa %s2453, 1

</llo_original>
